<compile_context>
chip_gen: v7x
topology: tpu7x:2x2x1
jax: 0.10.0
libtpu: 0.0.40
codegen_flags: <defaults>
</compile_context>

<pallas_src>
import jax
import jax.numpy as jnp
from jax import lax
from jax.experimental import pallas as pl
from jax.experimental.pallas import tpu as pltpu

NEG_SLOPE = 0.2  # GATConv default negative_slope


# ---------------------------------------------------------------------------
# Kernel
# ---------------------------------------------------------------------------
def _gat_layer(x, adj_bias, w_aug, p):
    """One GATConv (heads=1) layer on a dense additive mask, fused ReLU.

    x        : (N, Fin)       f32 activations
    adj_bias : (N, N)         f32 additive mask (0 edge j->i, -1e30 otherwise)
    w_aug    : (Fin, Fout+1)  bf16  [W | W @ att_dst]
    p        : (2, Pmax)      f32   row 0: v_src = W @ att_src (first Fin cols)
                                    row 1: bias                (first Fout cols)
    """
    fin = w_aug.shape[0]
    fout = w_aug.shape[1] - 1

    x_bf = x.astype(jnp.bfloat16)

    # h and the destination logit column in ONE MXU op (att_dst folded into W)
    h_aug = jnp.dot(x_bf, w_aug, preferred_element_type=jnp.float32)  # (N,Fout+1)
    h = h_aug[:, :fout]                                               # (N,Fout)
    a_dst_col = h_aug[:, fout:fout + 1]                               # (N,1)

    # source logits straight from x (independent of the first matmul):
    # a_src[j] = <h[j], att_src> = x[j] . (W @ att_src)
    v_src = p[0:1, :fin].astype(jnp.bfloat16)                         # (1,Fin)
    a_src_row = lax.dot_general(v_src, x_bf, (((1,), (1,)), ((), ())),
                                preferred_element_type=jnp.float32)   # (1,N)

    bias = p[1:2, :fout]                                              # (1,Fout)

    # e[i, j] = LeakyReLU(a_dst[i] + a_src[j]) + additive mask
    s = a_dst_col + a_src_row                                         # (N,N)
    e = jnp.maximum(s, NEG_SLOPE * s) + adj_bias

    # row-wise softmax over incoming edges; masked entries underflow to 0,
    # self-loops guarantee denom > 0.
    m = jnp.max(e, axis=-1, keepdims=True)
    pexp = jnp.exp(e - m)
    denom = jnp.sum(pexp, axis=-1, keepdims=True)
    attn = pexp * pl.reciprocal(denom, approx=True)                   # EUP

    # aggregate + bias (MXU, bf16 in / f32 acc), fused ReLU
    out = jnp.dot(attn.astype(jnp.bfloat16), h.astype(jnp.bfloat16),
                  preferred_element_type=jnp.float32) + bias
    return jnp.maximum(out, 0.0)


def dual_gat_kernel(x_ref, adjb_ref, w1_ref, w2_ref, p1_ref, p2_ref, o_ref):
    x = x_ref[0]                         # (N, Fin) f32, current graph
    adjb = adjb_ref[0]                   # (2, N, N) f32 additive masks

    outs = []
    for br in range(2):                  # 0: conv branch, 1: cross branch
        adj_bias = adjb[br]
        h = _gat_layer(x, adj_bias, w1_ref[br], p1_ref[br])   # conv1/cross1
        # dropout == identity (eval semantics)
        h = _gat_layer(h, adj_bias, w2_ref[br], p2_ref[br])   # conv2/cross2
        outs.append(h)

    # fused concat, single contiguous store
    o_ref[0] = jnp.concatenate(outs, axis=-1)


# ---------------------------------------------------------------------------
# Host-side packing / wrappers
# ---------------------------------------------------------------------------
def build_adj_bias(edge_index, num_nodes):
    """bias[i, j] = 0.0 if there is an edge j -> i (self-loops incl.), -1e30 otherwise."""
    src = edge_index[0]
    dst = edge_index[1]
    adj = jnp.zeros((num_nodes, num_nodes), jnp.float32)
    adj = adj.at[dst, src].set(1.0)
    idx = jnp.arange(num_nodes)
    adj = adj.at[idx, idx].set(1.0)          # add_self_loops=True
    return jnp.where(adj > 0, 0.0, -1e30).astype(jnp.float32)


def _pack_depth(pa, pb):
    """Pack the two branches of one depth.

    pa, pb: (W, att_src, att_dst, bias) with W (Fin, Fout).
    Returns:
      w_pack: (2, Fin, Fout+1) bf16  -- [W | W @ att_dst] per branch
      p_pack: (2, 2, Pmax)     f32   -- [v_src padded, bias padded] per branch
    """
    def augment(w, att_dst):
        return jnp.concatenate([w, w @ att_dst[:, None]], axis=1)

    wa, sa, da, ba = pa
    wb, sb, db, bb = pb
    fin, fout = wa.shape
    pmax = max(fin, fout)

    def pad(v):
        return jnp.pad(v.astype(jnp.float32), (0, pmax - v.shape[0]))

    w_pack = jnp.stack([augment(wa, da), augment(wb, db)], 0).astype(jnp.bfloat16)
    p_pack = jnp.stack([jnp.stack([pad(wa @ sa), pad(ba)], 0),
                        jnp.stack([pad(wb @ sb), pad(bb)], 0)], 0)
    return w_pack, p_pack


def _cost_estimate(B, N, Fin, Fhid, Fout):
    flops = 0
    for fi, fo in ((Fin, Fhid), (Fhid, Fout)):
        flops += 2 * N * fi * (fo + 1)       # x @ W_aug
        flops += 2 * N * fi                  # source-logit row
        flops += 2 * N * N * fo              # attn @ h
        flops += 8 * N * N                   # leaky / mask / softmax elementwise
    flops *= 2 * B                           # two branches, B graphs
    transcendentals = 2 * B * 2 * (N * N + N)
    bytes_accessed = (4 * B * N * Fin + 4 * B * 2 * N * N
                      + 2 * (2 * Fin * (Fhid + 1) + 2 * Fhid * (Fout + 1))
                      + 4 * (4 * max(Fin, Fhid) + 4 * max(Fhid, Fout))
                      + 4 * B * N * 2 * Fout)
    return pl.CostEstimate(flops=flops, transcendentals=transcendentals,
                           bytes_accessed=bytes_accessed)


def dual_gat_forward_batched(x, adj_bias, adj_bias_cross, params):
    """x: (B, N, Fin); adj_bias*: (B, N, N) additive masks."""
    B, N, Fin = x.shape
    Fhid = params["conv1"][0].shape[1]
    Fout = params["conv2"][0].shape[1]

    w1, p1 = _pack_depth(params["conv1"], params["cross1"])
    w2, p2 = _pack_depth(params["conv2"], params["cross2"])
    adjb = jnp.stack([adj_bias, adj_bias_cross], axis=1)      # (B, 2, N, N)

    fixed = lambda b: (0, 0, 0)
    return pl.pallas_call(
        dual_gat_kernel,
        out_shape=jax.ShapeDtypeStruct((B, N, 2 * Fout), jnp.float32),
        grid=(B,),
        in_specs=[
            pl.BlockSpec((1, N, Fin), lambda b: (b, 0, 0)),
            pl.BlockSpec((1, 2, N, N), lambda b: (b, 0, 0, 0)),
            pl.BlockSpec(w1.shape, fixed),
            pl.BlockSpec(w2.shape, fixed),
            pl.BlockSpec(p1.shape, fixed),
            pl.BlockSpec(p2.shape, fixed),
        ],
        out_specs=pl.BlockSpec((1, N, 2 * Fout), lambda b: (b, 0, 0)),
        compiler_params=pltpu.CompilerParams(
            dimension_semantics=("parallel",),
            vmem_limit_bytes=32 * 1024 * 1024),
        cost_estimate=_cost_estimate(B, N, Fin, Fhid, Fout),
    )(x.astype(jnp.float32), adjb, w1, w2, p1, p2)


def dual_gat_forward(x, edge_index, cross_edge_index, params):
    """Single-graph entry point (matches the PyTorch module's signature)."""
    n = x.shape[0]
    adjb = build_adj_bias(edge_index, n)[None]
    adjbc = build_adj_bias(cross_edge_index, n)[None]
    return dual_gat_forward_batched(x[None], adjb, adjbc, params)[0]


def init_gat_params(key, fin, fout):
    k1, k2, k3 = jax.random.split(key, 3)
    w = jax.random.normal(k1, (fin, fout), jnp.float32) / jnp.sqrt(float(fin))
    att_src = jax.random.normal(k2, (fout,), jnp.float32) * 0.1
    att_dst = jax.random.normal(k3, (fout,), jnp.float32) * 0.1
    bias = jnp.zeros((fout,), jnp.float32)
    return (w, att_src, att_dst, bias)


# ---------------------------------------------------------------------------
# Pure-JAX reference (f32, exact softmax) for a loose-tolerance check
# ---------------------------------------------------------------------------
def _gat_layer_ref(x, adj_bias, w, att_src, att_dst, bias):
    h = x @ w
    a_src = h @ att_src
    a_dst = h @ att_dst
    s = a_dst[:, None] + a_src[None, :]
    e = jnp.where(s > 0, s, NEG_SLOPE * s) + adj_bias
    attn = jax.nn.softmax(e, axis=-1)
    return jnp.maximum(attn @ h + bias, 0.0)


def _dual_gat_ref(x, adj_bias, adj_bias_cross, params):
    x1 = _gat_layer_ref(x, adj_bias, *params["conv1"])
    x1 = _gat_layer_ref(x1, adj_bias, *params["conv2"])
    x2 = _gat_layer_ref(x, adj_bias_cross, *params["cross1"])
    x2 = _gat_layer_ref(x2, adj_bias_cross, *params["cross2"])
    return jnp.concatenate([x1, x2], axis=-1)


if __name__ == "__main__":
    key = jax.random.PRNGKey(0)
    ks = jax.random.split(key, 12)

    B = 2                                      # batch of graphs ("parallel" grid axis)
    num_nodes = 16
    input_dim, hidden_dim, output_dim = 16, 32, 32
    num_edges, num_cross_edges = 32, 24

    x = jax.random.normal(ks[0], (B, num_nodes, input_dim), jnp.float32)

    adjb_list, adjbc_list = [], []
    for g in range(B):
        ei = jax.random.randint(ks[1 + g], (2, num_edges), 0, num_nodes)
        eic = jax.random.randint(ks[3 + g], (2, num_cross_edges), 0, num_nodes)
        adjb_list.append(build_adj_bias(ei, num_nodes))
        adjbc_list.append(build_adj_bias(eic, num_nodes))
    adj_bias = jnp.stack(adjb_list, 0)
    adj_bias_cross = jnp.stack(adjbc_list, 0)

    params = {
        "conv1": init_gat_params(ks[6], input_dim, hidden_dim),
        "conv2": init_gat_params(ks[7], hidden_dim, output_dim),
        "cross1": init_gat_params(ks[8], input_dim, hidden_dim),
        "cross2": init_gat_params(ks[9], hidden_dim, output_dim),
    }

    out = dual_gat_forward_batched(x, adj_bias, adj_bias_cross, params)
    jax.block_until_ready(out)

    assert out.shape == (B, num_nodes, 2 * output_dim), out.shape
    assert out.dtype == jnp.float32
    assert bool(jnp.all(jnp.isfinite(out)))

    # loose tolerance: kernel uses bf16 MXU operands + approx reciprocal
    ref = jax.vmap(lambda xb, ab, acb: _dual_gat_ref(xb, ab, acb, params))(
        x, adj_bias, adj_bias_cross)
    err = float(jnp.max(jnp.abs(out - ref)) / (jnp.max(jnp.abs(ref)) + 1e-6))
    assert err < 0.1, f"max relative error {err}"

    print("KERNEL_OK")
</pallas_src>

<mosaic_0001>
module attributes {stable_mosaic.version = 11 : i64} {
  func.func @dual_gat_kernel(%arg0: i32, %arg1: memref<1x16x16xf32, #tpu.memory_space<vmem>>, %arg2: memref<1x2x16x16xf32, #tpu.memory_space<vmem>>, %arg3: memref<2x16x33xbf16, #tpu.memory_space<vmem>>, %arg4: memref<2x32x33xbf16, #tpu.memory_space<vmem>>, %arg5: memref<2x2x32xf32, #tpu.memory_space<vmem>>, %arg6: memref<2x2x32xf32, #tpu.memory_space<vmem>>, %arg7: memref<1x16x64xf32, #tpu.memory_space<vmem>>) attributes {dimension_semantics = [#tpu.dimension_semantics<parallel>], iteration_bounds = array<i64: 2>, scalar_prefetch = 0 : i64, scratch_operands = 0 : i64, tpu.core_type = #tpu.core_type<tc>, window_params = [{transform_indices = @transform_0, window_bounds = array<i64: 1, 16, 16>}, {transform_indices = @transform_1, window_bounds = array<i64: 1, 2, 16, 16>}, {pipeline_mode = #tpu.pipeline_mode<synchronous>, transform_indices = @transform_2, window_bounds = array<i64: 2, 16, 33>}, {pipeline_mode = #tpu.pipeline_mode<synchronous>, transform_indices = @transform_3, window_bounds = array<i64: 2, 32, 33>}, {pipeline_mode = #tpu.pipeline_mode<synchronous>, transform_indices = @transform_4, window_bounds = array<i64: 2, 2, 32>}, {pipeline_mode = #tpu.pipeline_mode<synchronous>, transform_indices = @transform_5, window_bounds = array<i64: 2, 2, 32>}, {transform_indices = @transform_6, window_bounds = array<i64: 1, 16, 64>}]} {
    %c0 = arith.constant 0 : index
    %c0_0 = arith.constant 0 : index
    %c0_1 = arith.constant 0 : index
    %0 = vector.load %arg1[%c0, %c0_0, %c0_1] : memref<1x16x16xf32, #tpu.memory_space<vmem>>, vector<1x16x16xf32>
    %1 = vector.shape_cast %0 : vector<1x16x16xf32> to vector<16x16xf32>
    %c0_2 = arith.constant 0 : index
    %c0_3 = arith.constant 0 : index
    %c0_4 = arith.constant 0 : index
    %c0_5 = arith.constant 0 : index
    %2 = vector.load %arg2[%c0_2, %c0_3, %c0_4, %c0_5] : memref<1x2x16x16xf32, #tpu.memory_space<vmem>>, vector<1x2x16x16xf32>
    %3 = vector.shape_cast %2 : vector<1x2x16x16xf32> to vector<2x16x16xf32>
    %4 = vector.extract_strided_slice %3 {offsets = [0, 0, 0], sizes = [1, 16, 16], strides = [1, 1, 1]} : vector<2x16x16xf32> to vector<1x16x16xf32>
    %5 = vector.shape_cast %4 : vector<1x16x16xf32> to vector<16x16xf32>
    %c0_6 = arith.constant 0 : index
    %c0_7 = arith.constant 0 : index
    %c0_8 = arith.constant 0 : index
    %6 = vector.load %arg3[%c0_6, %c0_7, %c0_8] : memref<2x16x33xbf16, #tpu.memory_space<vmem>>, vector<1x16x33xbf16>
    %7 = vector.shape_cast %6 : vector<1x16x33xbf16> to vector<16x33xbf16>
    %c0_9 = arith.constant 0 : index
    %c0_10 = arith.constant 0 : index
    %c0_11 = arith.constant 0 : index
    %8 = vector.load %arg5[%c0_9, %c0_10, %c0_11] : memref<2x2x32xf32, #tpu.memory_space<vmem>>, vector<1x2x32xf32>
    %9 = vector.shape_cast %8 : vector<1x2x32xf32> to vector<2x32xf32>
    %10 = arith.truncf %1 : vector<16x16xf32> to vector<16x16xbf16>
    %cst = arith.constant dense<0.000000e+00> : vector<16x33xf32>
    %11 = tpu.matmul %10, %7, %cst {dimension_numbers = #tpu.dot_dimension_numbers<[1], [0], [0], [1], [0, 0, 1, 1], [], []>} : vector<16x16xbf16>, vector<16x33xbf16>, vector<16x33xf32> -> vector<16x33xf32>
    %12 = vector.extract_strided_slice %11 {offsets = [0, 0], sizes = [16, 32], strides = [1, 1]} : vector<16x33xf32> to vector<16x32xf32>
    %13 = vector.extract_strided_slice %11 {offsets = [0, 32], sizes = [16, 1], strides = [1, 1]} : vector<16x33xf32> to vector<16x1xf32>
    %14 = vector.extract_strided_slice %9 {offsets = [0, 0], sizes = [1, 16], strides = [1, 1]} : vector<2x32xf32> to vector<1x16xf32>
    %15 = arith.truncf %14 : vector<1x16xf32> to vector<1x16xbf16>
    %cst_12 = arith.constant dense<0.000000e+00> : vector<1x16xf32>
    %16 = tpu.matmul %15, %10, %cst_12 {dimension_numbers = #tpu.dot_dimension_numbers<[1], [1], [0], [0], [0, 0, 1, 0], [], []>} : vector<1x16xbf16>, vector<16x16xbf16>, vector<1x16xf32> -> vector<1x16xf32>
    %17 = vector.extract_strided_slice %9 {offsets = [1, 0], sizes = [1, 32], strides = [1, 1]} : vector<2x32xf32> to vector<1x32xf32>
    %18 = vector.broadcast %13 : vector<16x1xf32> to vector<16x16xf32>
    %19 = vector.broadcast %16 : vector<1x16xf32> to vector<16x16xf32>
    %20 = arith.addf %18, %19 : vector<16x16xf32>
    %cst_13 = arith.constant 2.000000e-01 : f32
    %21 = vector.broadcast %cst_13 : f32 to vector<16x16xf32>
    %22 = arith.mulf %21, %20 : vector<16x16xf32>
    %23 = arith.maximumf %20, %22 : vector<16x16xf32>
    %24 = arith.addf %23, %5 : vector<16x16xf32>
    %cst_14 = arith.constant dense<0xFF800000> : vector<16xf32>
    %25 = vector.multi_reduction <maximumf>, %24, %cst_14 [1] : vector<16x16xf32> to vector<16xf32>
    %26 = vector.shape_cast %25 : vector<16xf32> to vector<16x1xf32>
    %27 = vector.broadcast %26 : vector<16x1xf32> to vector<16x16xf32>
    %28 = arith.subf %24, %27 : vector<16x16xf32>
    %29 = math.exp %28 : vector<16x16xf32>
    %cst_15 = arith.constant dense<0.000000e+00> : vector<16xf32>
    %30 = vector.multi_reduction <add>, %29, %cst_15 [1] : vector<16x16xf32> to vector<16xf32>
    %31 = vector.shape_cast %30 : vector<16xf32> to vector<16x1xf32>
    %32 = tpu.reciprocal %31 {approx = true} : vector<16x1xf32> -> vector<16x1xf32>
    %33 = vector.broadcast %32 : vector<16x1xf32> to vector<16x16xf32>
    %34 = arith.mulf %29, %33 : vector<16x16xf32>
    %35 = arith.truncf %34 : vector<16x16xf32> to vector<16x16xbf16>
    %36 = arith.truncf %12 : vector<16x32xf32> to vector<16x32xbf16>
    %cst_16 = arith.constant dense<0.000000e+00> : vector<16x32xf32>
    %37 = tpu.matmul %35, %36, %cst_16 {dimension_numbers = #tpu.dot_dimension_numbers<[1], [0], [0], [1], [0, 0, 1, 1], [], []>} : vector<16x16xbf16>, vector<16x32xbf16>, vector<16x32xf32> -> vector<16x32xf32>
    %38 = vector.broadcast %17 : vector<1x32xf32> to vector<16x32xf32>
    %39 = arith.addf %37, %38 : vector<16x32xf32>
    %cst_17 = arith.constant 0.000000e+00 : f32
    %40 = vector.broadcast %cst_17 : f32 to vector<16x32xf32>
    %41 = arith.maximumf %39, %40 : vector<16x32xf32>
    %c0_18 = arith.constant 0 : index
    %c0_19 = arith.constant 0 : index
    %c0_20 = arith.constant 0 : index
    %42 = vector.load %arg4[%c0_18, %c0_19, %c0_20] : memref<2x32x33xbf16, #tpu.memory_space<vmem>>, vector<1x32x33xbf16>
    %43 = vector.shape_cast %42 : vector<1x32x33xbf16> to vector<32x33xbf16>
    %c0_21 = arith.constant 0 : index
    %c0_22 = arith.constant 0 : index
    %c0_23 = arith.constant 0 : index
    %44 = vector.load %arg6[%c0_21, %c0_22, %c0_23] : memref<2x2x32xf32, #tpu.memory_space<vmem>>, vector<1x2x32xf32>
    %45 = vector.shape_cast %44 : vector<1x2x32xf32> to vector<2x32xf32>
    %46 = arith.truncf %41 : vector<16x32xf32> to vector<16x32xbf16>
    %cst_24 = arith.constant dense<0.000000e+00> : vector<16x33xf32>
    %47 = tpu.matmul %46, %43, %cst_24 {dimension_numbers = #tpu.dot_dimension_numbers<[1], [0], [0], [1], [0, 0, 1, 1], [], []>} : vector<16x32xbf16>, vector<32x33xbf16>, vector<16x33xf32> -> vector<16x33xf32>
    %48 = vector.extract_strided_slice %47 {offsets = [0, 0], sizes = [16, 32], strides = [1, 1]} : vector<16x33xf32> to vector<16x32xf32>
    %49 = vector.extract_strided_slice %47 {offsets = [0, 32], sizes = [16, 1], strides = [1, 1]} : vector<16x33xf32> to vector<16x1xf32>
    %50 = vector.extract_strided_slice %45 {offsets = [0, 0], sizes = [1, 32], strides = [1, 1]} : vector<2x32xf32> to vector<1x32xf32>
    %51 = arith.truncf %50 : vector<1x32xf32> to vector<1x32xbf16>
    %cst_25 = arith.constant dense<0.000000e+00> : vector<1x16xf32>
    %52 = tpu.matmul %51, %46, %cst_25 {dimension_numbers = #tpu.dot_dimension_numbers<[1], [1], [0], [0], [0, 0, 1, 0], [], []>} : vector<1x32xbf16>, vector<16x32xbf16>, vector<1x16xf32> -> vector<1x16xf32>
    %53 = vector.extract_strided_slice %45 {offsets = [1, 0], sizes = [1, 32], strides = [1, 1]} : vector<2x32xf32> to vector<1x32xf32>
    %54 = vector.broadcast %49 : vector<16x1xf32> to vector<16x16xf32>
    %55 = vector.broadcast %52 : vector<1x16xf32> to vector<16x16xf32>
    %56 = arith.addf %54, %55 : vector<16x16xf32>
    %cst_26 = arith.constant 2.000000e-01 : f32
    %57 = vector.broadcast %cst_26 : f32 to vector<16x16xf32>
    %58 = arith.mulf %57, %56 : vector<16x16xf32>
    %59 = arith.maximumf %56, %58 : vector<16x16xf32>
    %60 = arith.addf %59, %5 : vector<16x16xf32>
    %cst_27 = arith.constant dense<0xFF800000> : vector<16xf32>
    %61 = vector.multi_reduction <maximumf>, %60, %cst_27 [1] : vector<16x16xf32> to vector<16xf32>
    %62 = vector.shape_cast %61 : vector<16xf32> to vector<16x1xf32>
    %63 = vector.broadcast %62 : vector<16x1xf32> to vector<16x16xf32>
    %64 = arith.subf %60, %63 : vector<16x16xf32>
    %65 = math.exp %64 : vector<16x16xf32>
    %cst_28 = arith.constant dense<0.000000e+00> : vector<16xf32>
    %66 = vector.multi_reduction <add>, %65, %cst_28 [1] : vector<16x16xf32> to vector<16xf32>
    %67 = vector.shape_cast %66 : vector<16xf32> to vector<16x1xf32>
    %68 = tpu.reciprocal %67 {approx = true} : vector<16x1xf32> -> vector<16x1xf32>
    %69 = vector.broadcast %68 : vector<16x1xf32> to vector<16x16xf32>
    %70 = arith.mulf %65, %69 : vector<16x16xf32>
    %71 = arith.truncf %70 : vector<16x16xf32> to vector<16x16xbf16>
    %72 = arith.truncf %48 : vector<16x32xf32> to vector<16x32xbf16>
    %cst_29 = arith.constant dense<0.000000e+00> : vector<16x32xf32>
    %73 = tpu.matmul %71, %72, %cst_29 {dimension_numbers = #tpu.dot_dimension_numbers<[1], [0], [0], [1], [0, 0, 1, 1], [], []>} : vector<16x16xbf16>, vector<16x32xbf16>, vector<16x32xf32> -> vector<16x32xf32>
    %74 = vector.broadcast %53 : vector<1x32xf32> to vector<16x32xf32>
    %75 = arith.addf %73, %74 : vector<16x32xf32>
    %cst_30 = arith.constant 0.000000e+00 : f32
    %76 = vector.broadcast %cst_30 : f32 to vector<16x32xf32>
    %77 = arith.maximumf %75, %76 : vector<16x32xf32>
    %78 = vector.extract_strided_slice %3 {offsets = [1, 0, 0], sizes = [1, 16, 16], strides = [1, 1, 1]} : vector<2x16x16xf32> to vector<1x16x16xf32>
    %79 = vector.shape_cast %78 : vector<1x16x16xf32> to vector<16x16xf32>
    %c1 = arith.constant 1 : index
    %c0_31 = arith.constant 0 : index
    %c0_32 = arith.constant 0 : index
    %80 = vector.load %arg3[%c1, %c0_31, %c0_32] : memref<2x16x33xbf16, #tpu.memory_space<vmem>>, vector<1x16x33xbf16>
    %81 = vector.shape_cast %80 : vector<1x16x33xbf16> to vector<16x33xbf16>
    %c1_33 = arith.constant 1 : index
    %c0_34 = arith.constant 0 : index
    %c0_35 = arith.constant 0 : index
    %82 = vector.load %arg5[%c1_33, %c0_34, %c0_35] : memref<2x2x32xf32, #tpu.memory_space<vmem>>, vector<1x2x32xf32>
    %83 = vector.shape_cast %82 : vector<1x2x32xf32> to vector<2x32xf32>
    %84 = arith.truncf %1 : vector<16x16xf32> to vector<16x16xbf16>
    %cst_36 = arith.constant dense<0.000000e+00> : vector<16x33xf32>
    %85 = tpu.matmul %84, %81, %cst_36 {dimension_numbers = #tpu.dot_dimension_numbers<[1], [0], [0], [1], [0, 0, 1, 1], [], []>} : vector<16x16xbf16>, vector<16x33xbf16>, vector<16x33xf32> -> vector<16x33xf32>
    %86 = vector.extract_strided_slice %85 {offsets = [0, 0], sizes = [16, 32], strides = [1, 1]} : vector<16x33xf32> to vector<16x32xf32>
    %87 = vector.extract_strided_slice %85 {offsets = [0, 32], sizes = [16, 1], strides = [1, 1]} : vector<16x33xf32> to vector<16x1xf32>
    %88 = vector.extract_strided_slice %83 {offsets = [0, 0], sizes = [1, 16], strides = [1, 1]} : vector<2x32xf32> to vector<1x16xf32>
    %89 = arith.truncf %88 : vector<1x16xf32> to vector<1x16xbf16>
    %cst_37 = arith.constant dense<0.000000e+00> : vector<1x16xf32>
    %90 = tpu.matmul %89, %84, %cst_37 {dimension_numbers = #tpu.dot_dimension_numbers<[1], [1], [0], [0], [0, 0, 1, 0], [], []>} : vector<1x16xbf16>, vector<16x16xbf16>, vector<1x16xf32> -> vector<1x16xf32>
    %91 = vector.extract_strided_slice %83 {offsets = [1, 0], sizes = [1, 32], strides = [1, 1]} : vector<2x32xf32> to vector<1x32xf32>
    %92 = vector.broadcast %87 : vector<16x1xf32> to vector<16x16xf32>
    %93 = vector.broadcast %90 : vector<1x16xf32> to vector<16x16xf32>
    %94 = arith.addf %92, %93 : vector<16x16xf32>
    %cst_38 = arith.constant 2.000000e-01 : f32
    %95 = vector.broadcast %cst_38 : f32 to vector<16x16xf32>
    %96 = arith.mulf %95, %94 : vector<16x16xf32>
    %97 = arith.maximumf %94, %96 : vector<16x16xf32>
    %98 = arith.addf %97, %79 : vector<16x16xf32>
    %cst_39 = arith.constant dense<0xFF800000> : vector<16xf32>
    %99 = vector.multi_reduction <maximumf>, %98, %cst_39 [1] : vector<16x16xf32> to vector<16xf32>
    %100 = vector.shape_cast %99 : vector<16xf32> to vector<16x1xf32>
    %101 = vector.broadcast %100 : vector<16x1xf32> to vector<16x16xf32>
    %102 = arith.subf %98, %101 : vector<16x16xf32>
    %103 = math.exp %102 : vector<16x16xf32>
    %cst_40 = arith.constant dense<0.000000e+00> : vector<16xf32>
    %104 = vector.multi_reduction <add>, %103, %cst_40 [1] : vector<16x16xf32> to vector<16xf32>
    %105 = vector.shape_cast %104 : vector<16xf32> to vector<16x1xf32>
    %106 = tpu.reciprocal %105 {approx = true} : vector<16x1xf32> -> vector<16x1xf32>
    %107 = vector.broadcast %106 : vector<16x1xf32> to vector<16x16xf32>
    %108 = arith.mulf %103, %107 : vector<16x16xf32>
    %109 = arith.truncf %108 : vector<16x16xf32> to vector<16x16xbf16>
    %110 = arith.truncf %86 : vector<16x32xf32> to vector<16x32xbf16>
    %cst_41 = arith.constant dense<0.000000e+00> : vector<16x32xf32>
    %111 = tpu.matmul %109, %110, %cst_41 {dimension_numbers = #tpu.dot_dimension_numbers<[1], [0], [0], [1], [0, 0, 1, 1], [], []>} : vector<16x16xbf16>, vector<16x32xbf16>, vector<16x32xf32> -> vector<16x32xf32>
    %112 = vector.broadcast %91 : vector<1x32xf32> to vector<16x32xf32>
    %113 = arith.addf %111, %112 : vector<16x32xf32>
    %cst_42 = arith.constant 0.000000e+00 : f32
    %114 = vector.broadcast %cst_42 : f32 to vector<16x32xf32>
    %115 = arith.maximumf %113, %114 : vector<16x32xf32>
    %c1_43 = arith.constant 1 : index
    %c0_44 = arith.constant 0 : index
    %c0_45 = arith.constant 0 : index
    %116 = vector.load %arg4[%c1_43, %c0_44, %c0_45] : memref<2x32x33xbf16, #tpu.memory_space<vmem>>, vector<1x32x33xbf16>
    %117 = vector.shape_cast %116 : vector<1x32x33xbf16> to vector<32x33xbf16>
    %c1_46 = arith.constant 1 : index
    %c0_47 = arith.constant 0 : index
    %c0_48 = arith.constant 0 : index
    %118 = vector.load %arg6[%c1_46, %c0_47, %c0_48] : memref<2x2x32xf32, #tpu.memory_space<vmem>>, vector<1x2x32xf32>
    %119 = vector.shape_cast %118 : vector<1x2x32xf32> to vector<2x32xf32>
    %120 = arith.truncf %115 : vector<16x32xf32> to vector<16x32xbf16>
    %cst_49 = arith.constant dense<0.000000e+00> : vector<16x33xf32>
    %121 = tpu.matmul %120, %117, %cst_49 {dimension_numbers = #tpu.dot_dimension_numbers<[1], [0], [0], [1], [0, 0, 1, 1], [], []>} : vector<16x32xbf16>, vector<32x33xbf16>, vector<16x33xf32> -> vector<16x33xf32>
    %122 = vector.extract_strided_slice %121 {offsets = [0, 0], sizes = [16, 32], strides = [1, 1]} : vector<16x33xf32> to vector<16x32xf32>
    %123 = vector.extract_strided_slice %121 {offsets = [0, 32], sizes = [16, 1], strides = [1, 1]} : vector<16x33xf32> to vector<16x1xf32>
    %124 = vector.extract_strided_slice %119 {offsets = [0, 0], sizes = [1, 32], strides = [1, 1]} : vector<2x32xf32> to vector<1x32xf32>
    %125 = arith.truncf %124 : vector<1x32xf32> to vector<1x32xbf16>
    %cst_50 = arith.constant dense<0.000000e+00> : vector<1x16xf32>
    %126 = tpu.matmul %125, %120, %cst_50 {dimension_numbers = #tpu.dot_dimension_numbers<[1], [1], [0], [0], [0, 0, 1, 0], [], []>} : vector<1x32xbf16>, vector<16x32xbf16>, vector<1x16xf32> -> vector<1x16xf32>
    %127 = vector.extract_strided_slice %119 {offsets = [1, 0], sizes = [1, 32], strides = [1, 1]} : vector<2x32xf32> to vector<1x32xf32>
    %128 = vector.broadcast %123 : vector<16x1xf32> to vector<16x16xf32>
    %129 = vector.broadcast %126 : vector<1x16xf32> to vector<16x16xf32>
    %130 = arith.addf %128, %129 : vector<16x16xf32>
    %cst_51 = arith.constant 2.000000e-01 : f32
    %131 = vector.broadcast %cst_51 : f32 to vector<16x16xf32>
    %132 = arith.mulf %131, %130 : vector<16x16xf32>
    %133 = arith.maximumf %130, %132 : vector<16x16xf32>
    %134 = arith.addf %133, %79 : vector<16x16xf32>
    %cst_52 = arith.constant dense<0xFF800000> : vector<16xf32>
    %135 = vector.multi_reduction <maximumf>, %134, %cst_52 [1] : vector<16x16xf32> to vector<16xf32>
    %136 = vector.shape_cast %135 : vector<16xf32> to vector<16x1xf32>
    %137 = vector.broadcast %136 : vector<16x1xf32> to vector<16x16xf32>
    %138 = arith.subf %134, %137 : vector<16x16xf32>
    %139 = math.exp %138 : vector<16x16xf32>
    %cst_53 = arith.constant dense<0.000000e+00> : vector<16xf32>
    %140 = vector.multi_reduction <add>, %139, %cst_53 [1] : vector<16x16xf32> to vector<16xf32>
    %141 = vector.shape_cast %140 : vector<16xf32> to vector<16x1xf32>
    %142 = tpu.reciprocal %141 {approx = true} : vector<16x1xf32> -> vector<16x1xf32>
    %143 = vector.broadcast %142 : vector<16x1xf32> to vector<16x16xf32>
    %144 = arith.mulf %139, %143 : vector<16x16xf32>
    %145 = arith.truncf %144 : vector<16x16xf32> to vector<16x16xbf16>
    %146 = arith.truncf %122 : vector<16x32xf32> to vector<16x32xbf16>
    %cst_54 = arith.constant dense<0.000000e+00> : vector<16x32xf32>
    %147 = tpu.matmul %145, %146, %cst_54 {dimension_numbers = #tpu.dot_dimension_numbers<[1], [0], [0], [1], [0, 0, 1, 1], [], []>} : vector<16x16xbf16>, vector<16x32xbf16>, vector<16x32xf32> -> vector<16x32xf32>
    %148 = vector.broadcast %127 : vector<1x32xf32> to vector<16x32xf32>
    %149 = arith.addf %147, %148 : vector<16x32xf32>
    %cst_55 = arith.constant 0.000000e+00 : f32
    %150 = vector.broadcast %cst_55 : f32 to vector<16x32xf32>
    %151 = arith.maximumf %149, %150 : vector<16x32xf32>
    %152 = tpu.concatenate %77, %151 in 1 : vector<16x32xf32>, vector<16x32xf32> -> vector<16x64xf32>
    %c0_56 = arith.constant 0 : index
    %c0_57 = arith.constant 0 : index
    %c0_58 = arith.constant 0 : index
    %153 = vector.load %arg7[%c0_56, %c0_57, %c0_58] : memref<1x16x64xf32, #tpu.memory_space<vmem>>, vector<1x16x64xf32>
    %154 = vector.shape_cast %153 : vector<1x16x64xf32> to vector<16x64xf32>
    %155 = vector.shape_cast %152 : vector<16x64xf32> to vector<1x16x64xf32>
    tpu.vector_store %arg7[%c0_56, %c0_57, %c0_58], %155 {strides = array<i32>} : memref<1x16x64xf32, #tpu.memory_space<vmem>>, vector<1x16x64xf32>,
    return
  }
  func.func @transform_0(%arg0: i32) -> (i32, i32, i32) {
    %c0_i32 = arith.constant 0 : i32
    %c0_i32_0 = arith.constant 0 : i32
    %c0_i32_1 = arith.constant 0 : i32
    return %arg0, %c0_i32, %c0_i32_0 : i32, i32, i32
  }
  func.func @transform_1(%arg0: i32) -> (i32, i32, i32, i32) {
    %c0_i32 = arith.constant 0 : i32
    %c0_i32_0 = arith.constant 0 : i32
    %c0_i32_1 = arith.constant 0 : i32
    %c0_i32_2 = arith.constant 0 : i32
    return %arg0, %c0_i32, %c0_i32_0, %c0_i32_1 : i32, i32, i32, i32
  }
  func.func @transform_2(%arg0: i32) -> (i32, i32, i32) {
    %c0_i32 = arith.constant 0 : i32
    %c0_i32_0 = arith.constant 0 : i32
    %c0_i32_1 = arith.constant 0 : i32
    %c0_i32_2 = arith.constant 0 : i32
    return %c0_i32, %c0_i32_0, %c0_i32_1 : i32, i32, i32
  }
  func.func @transform_3(%arg0: i32) -> (i32, i32, i32) {
    %c0_i32 = arith.constant 0 : i32
    %c0_i32_0 = arith.constant 0 : i32
    %c0_i32_1 = arith.constant 0 : i32
    %c0_i32_2 = arith.constant 0 : i32
    return %c0_i32, %c0_i32_0, %c0_i32_1 : i32, i32, i32
  }
  func.func @transform_4(%arg0: i32) -> (i32, i32, i32) {
    %c0_i32 = arith.constant 0 : i32
    %c0_i32_0 = arith.constant 0 : i32
    %c0_i32_1 = arith.constant 0 : i32
    %c0_i32_2 = arith.constant 0 : i32
    return %c0_i32, %c0_i32_0, %c0_i32_1 : i32, i32, i32
  }
  func.func @transform_5(%arg0: i32) -> (i32, i32, i32) {
    %c0_i32 = arith.constant 0 : i32
    %c0_i32_0 = arith.constant 0 : i32
    %c0_i32_1 = arith.constant 0 : i32
    %c0_i32_2 = arith.constant 0 : i32
    return %c0_i32, %c0_i32_0, %c0_i32_1 : i32, i32, i32
  }
  func.func @transform_6(%arg0: i32) -> (i32, i32, i32) {
    %c0_i32 = arith.constant 0 : i32
    %c0_i32_0 = arith.constant 0 : i32
    %c0_i32_1 = arith.constant 0 : i32
    return %arg0, %c0_i32, %c0_i32_0 : i32, i32, i32
  }
}

</mosaic_0001>

<llo_original>
// kernel: tpu_custom_call.1
$region0: #{tpu_custom_call.1}
  #allocation0 [shape = 'u32[]', space=smem, size = 0x4, offset = 0x4, fixed_abs, tag = 'smem constant byte address 0x4 - core index']
  #allocation1 [shape = 'u32[144,128]{1,0:T(1,128)}', space=vmem, size = 0x12000, scoped, tag = 'internal scratch']
  %s0 = inlined_call_operand.hbm [shape: f32[2,16,16], index: 0, kind: input, shape index: {}]
  %s1 = inlined_call_operand.hbm [shape: f32[2,2,16,16], index: 1, kind: input, shape index: {}]
  %s2 = inlined_call_operand.hbm [shape: bf16[2,16,33], index: 2, kind: input, shape index: {}]
  %s3 = inlined_call_operand.hbm [shape: bf16[2,32,33], index: 3, kind: input, shape index: {}]
  %s4 = inlined_call_operand.vmem [shape: f32[2,2,32], index: 4, kind: input, shape index: {}]
  %s5 = inlined_call_operand.vmem [shape: f32[2,2,32], index: 5, kind: input, shape index: {}]
  %s6 = inlined_call_operand.hbm [shape: f32[2,16,64], index: 6, kind: output, shape index: {}]
  %s7 = sld [smem:[#allocation0]]
  $region73: #{tpu_custom_call.1} parent=0
    _
  %s9 = ssub.s32 1, %s7
  %s10 = scalar_select 0, %s9, %s7
  $region1: #{tpu_custom_call.1} parent=0
    #allocation2 [shape = 'u8[16384]{0}', space=vmem, size = 0x4000, scoped, tag = 'input window, operand 0']
    #allocation3 [shape = 's32[2]{0}', space=sflag, size = 0x8, scoped, tag = 'scoped memory for tpu_custom_call.1']
    #allocation4 [shape = 's32[2]{0}', space=sflag, size = 0x8, scoped, tag = 'scoped memory for tpu_custom_call.1']
    #allocation5 [shape = 'u8[32768]{0}', space=vmem, size = 0x8000, scoped, tag = 'input window, operand 1']
    #allocation6 [shape = 's32[2]{0}', space=sflag, size = 0x8, scoped, tag = 'scoped memory for tpu_custom_call.1']
    #allocation7 [shape = 'u8[8192]{0}', space=vmem, size = 0x2000, scoped, tag = 'input window, operand 2, single buffered']
    #allocation8 [shape = 'u8[16384]{0}', space=vmem, size = 0x4000, scoped, tag = 'input window, operand 3, single buffered']
    #allocation9 [shape = 's32[1]{0}', space=sflag, size = 0x4, scoped, tag = 'scoped memory for tpu_custom_call.1']
    #allocation10 [shape = 'u8[16384]{0}', space=vmem, size = 0x4000, scoped, tag = 'output window, operand 0']
    %11 = vsyncpa [#allocation3], 0
    %s12 = scalar_lea.sflag [#allocation3], 1
    %13 = vsyncpa %s12, 0
    %14 = vsyncpa [#allocation6], 0
    %s15 = scalar_lea.sflag [#allocation6], 1
    %16 = vsyncpa %s15, 0
    %17 = vsyncpa [#allocation9], 0
    %18 = vsyncpa [#allocation4], 0
    %s19 = scalar_lea.sflag [#allocation4], 1
    %20 = vsyncpa %s19, 0
    loop: start=0, step=1, limit=4
    $region2: #{tpu_custom_call.1} parent=1 // loop_pre_header
      _
    $region3: #{tpu_custom_call.1} parent=1 // loop_header
      %s22 = sphi 0, %s26
      %p23 = scmp.ge.s32.totalorder %s22, 4
      %s32 = sphi 0, %s34
      %s35 = sphi 0, %s32
      %s36 = sphi 0, %s35
      %s52 = sphi 0, %s36
      %s58 = sphi 0, %s60
      %s61 = sphi 0, %s58
      %s62 = sphi 0, %s61
      %s78 = sphi 0, %s62
      %s82 = sphi 0, %s82
      %s84 = sphi 0, %s82
      %s85 = sphi 0, %s84
      %s99 = sphi 0, %s85
      %s103 = sphi 0, %s103
      %s105 = sphi 0, %s103
      %s106 = sphi 0, %s105
      %s120 = sphi 0, %s106
      %s124 = sphi 0, %s124
      %s126 = sphi 0, %s124
      %s127 = sphi 0, %s126
      %s141 = sphi 0, %s127
      %s145 = sphi 0, %s145
      %s147 = sphi 0, %s145
      %s148 = sphi 0, %s147
      %s162 = sphi 0, %s148
      %s168 = sphi 0, %s170
      %s171 = sphi 0, %s168
      %s172 = sphi 0, %s171
      %s188 = sphi 0, %s172
    $region4: #{tpu_custom_call.1} parent=1 // loop_header_branch
      %25 = sbr.rel (%p23) target = $region8
    $region5: #{tpu_custom_call.1} parent=1 // loop_body
      %s27 = ssub.s32 %s22, 1
      %s28 = ssub.s32 %s22, 2
      %s29 = sadd.s32 %s22, 1
      %s30 = ssub.s32 %s22, %s29
      %p31 = scmp.eq.s32.totalorder %s30, 0
      %s33 = sadd.s32 %s32, 1
      %s34 = scalar_select %p31, %s32, %s33
      %p37 = pneg %p31
      %p38 = scmp.eq.s32.totalorder %s22, 1
      %p39 = por %p37, %p38
      %p40 = scmp.ne.s32.totalorder %s32, %s35
      %p41 = scmp.eq.s32.totalorder %s22, 0
      %p42 = por %p40, %p41
      %p43 = scmp.ne.s32.totalorder %s32, %s35
      %p44 = scmp.eq.s32.totalorder %s27, 1
      %p45 = por %p43, %p44
      %p46 = scmp.ne.s32.totalorder %s35, %s36
      %p47 = scmp.eq.s32.totalorder %s27, 0
      %p48 = por %p46, %p47
      %p49 = scmp.ne.s32.totalorder %s35, %s36
      %p50 = scmp.eq.s32.totalorder %s28, 1
      %p51 = por %p49, %p50
      %p53 = scmp.ne.s32.totalorder %s36, %s52
      %p54 = scmp.eq.s32.totalorder %s28, 0
      %p55 = por %p53, %p54
      %s56 = ssub.s32 %s22, %s29
      %p57 = scmp.eq.s32.totalorder %s56, 0
      %s59 = sadd.s32 %s58, 1
      %s60 = scalar_select %p57, %s58, %s59
      %p63 = pneg %p57
      %p64 = scmp.eq.s32.totalorder %s22, 1
      %p65 = por %p63, %p64
      %p66 = scmp.ne.s32.totalorder %s58, %s61
      %p67 = scmp.eq.s32.totalorder %s22, 0
      %p68 = por %p66, %p67
      %p69 = scmp.ne.s32.totalorder %s58, %s61
      %p70 = scmp.eq.s32.totalorder %s27, 1
      %p71 = por %p69, %p70
      %p72 = scmp.ne.s32.totalorder %s61, %s62
      %p73 = scmp.eq.s32.totalorder %s27, 0
      %p74 = por %p72, %p73
      %p75 = scmp.ne.s32.totalorder %s61, %s62
      %p76 = scmp.eq.s32.totalorder %s28, 1
      %p77 = por %p75, %p76
      %p79 = scmp.ne.s32.totalorder %s62, %s78
      %p80 = scmp.eq.s32.totalorder %s28, 0
      %p81 = por %p79, %p80
      %s83 = sadd.s32 %s82, 1
      %p86 = scmp.eq.s32.totalorder %s22, 1
      %p87 = scmp.ne.s32.totalorder %s82, %s84
      %p88 = scmp.eq.s32.totalorder %s22, 0
      %p89 = por %p87, %p88
      %p90 = scmp.ne.s32.totalorder %s82, %s84
      %p91 = scmp.eq.s32.totalorder %s27, 1
      %p92 = por %p90, %p91
      %p93 = scmp.ne.s32.totalorder %s84, %s85
      %p94 = scmp.eq.s32.totalorder %s27, 0
      %p95 = por %p93, %p94
      %p96 = scmp.ne.s32.totalorder %s84, %s85
      %p97 = scmp.eq.s32.totalorder %s28, 1
      %p98 = por %p96, %p97
      %p100 = scmp.ne.s32.totalorder %s85, %s99
      %p101 = scmp.eq.s32.totalorder %s28, 0
      %p102 = por %p100, %p101
      %s104 = sadd.s32 %s103, 1
      %p107 = scmp.eq.s32.totalorder %s22, 1
      %p108 = scmp.ne.s32.totalorder %s103, %s105
      %p109 = scmp.eq.s32.totalorder %s22, 0
      %p110 = por %p108, %p109
      %p111 = scmp.ne.s32.totalorder %s103, %s105
      %p112 = scmp.eq.s32.totalorder %s27, 1
      %p113 = por %p111, %p112
      %p114 = scmp.ne.s32.totalorder %s105, %s106
      %p115 = scmp.eq.s32.totalorder %s27, 0
      %p116 = por %p114, %p115
      %p117 = scmp.ne.s32.totalorder %s105, %s106
      %p118 = scmp.eq.s32.totalorder %s28, 1
      %p119 = por %p117, %p118
      %p121 = scmp.ne.s32.totalorder %s106, %s120
      %p122 = scmp.eq.s32.totalorder %s28, 0
      %p123 = por %p121, %p122
      %s125 = sadd.s32 %s124, 1
      %p128 = scmp.eq.s32.totalorder %s22, 1
      %p129 = scmp.ne.s32.totalorder %s124, %s126
      %p130 = scmp.eq.s32.totalorder %s22, 0
      %p131 = por %p129, %p130
      %p132 = scmp.ne.s32.totalorder %s124, %s126
      %p133 = scmp.eq.s32.totalorder %s27, 1
      %p134 = por %p132, %p133
      %p135 = scmp.ne.s32.totalorder %s126, %s127
      %p136 = scmp.eq.s32.totalorder %s27, 0
      %p137 = por %p135, %p136
      %p138 = scmp.ne.s32.totalorder %s126, %s127
      %p139 = scmp.eq.s32.totalorder %s28, 1
      %p140 = por %p138, %p139
      %p142 = scmp.ne.s32.totalorder %s127, %s141
      %p143 = scmp.eq.s32.totalorder %s28, 0
      %p144 = por %p142, %p143
      %s146 = sadd.s32 %s145, 1
      %p149 = scmp.eq.s32.totalorder %s22, 1
      %p150 = scmp.ne.s32.totalorder %s145, %s147
      %p151 = scmp.eq.s32.totalorder %s22, 0
      %p152 = por %p150, %p151
      %p153 = scmp.ne.s32.totalorder %s145, %s147
      %p154 = scmp.eq.s32.totalorder %s27, 1
      %p155 = por %p153, %p154
      %p156 = scmp.ne.s32.totalorder %s147, %s148
      %p157 = scmp.eq.s32.totalorder %s27, 0
      %p158 = por %p156, %p157
      %p159 = scmp.ne.s32.totalorder %s147, %s148
      %p160 = scmp.eq.s32.totalorder %s28, 1
      %p161 = por %p159, %p160
      %p163 = scmp.ne.s32.totalorder %s148, %s162
      %p164 = scmp.eq.s32.totalorder %s28, 0
      %p165 = por %p163, %p164
      %s166 = ssub.s32 %s22, %s29
      %p167 = scmp.eq.s32.totalorder %s166, 0
      %s169 = sadd.s32 %s168, 1
      %s170 = scalar_select %p167, %s168, %s169
      %p173 = pneg %p167
      %p174 = scmp.eq.s32.totalorder %s22, 1
      %p175 = por %p173, %p174
      %p176 = scmp.ne.s32.totalorder %s168, %s171
      %p177 = scmp.eq.s32.totalorder %s22, 0
      %p178 = por %p176, %p177
      %p179 = scmp.ne.s32.totalorder %s168, %s171
      %p180 = scmp.eq.s32.totalorder %s27, 1
      %p181 = por %p179, %p180
      %p182 = scmp.ne.s32.totalorder %s171, %s172
      %p183 = scmp.eq.s32.totalorder %s27, 0
      %p184 = por %p182, %p183
      %p185 = scmp.ne.s32.totalorder %s171, %s172
      %p186 = scmp.eq.s32.totalorder %s28, 1
      %p187 = por %p185, %p186
      %p189 = scmp.ne.s32.totalorder %s172, %s188
      %p190 = scmp.eq.s32.totalorder %s28, 0
      %p191 = por %p189, %p190
      %p192 = scmp.le.s32.totalorder 1, %s22
      %p193 = scmp.lt.s32.totalorder %s22, 3
      %p194 = pnand %p192, %p193
      %p195 = pneg %p194
      // Predicated region
      $region9: #{tpu_custom_call.1} parent=5 // pred_check
        _
      $region10: #{tpu_custom_call.1} parent=5 // pred_check_branch
        %197 = sbr.rel (%p194) target = $region12
      $region11: #{tpu_custom_call.1} parent=5 // pred_region
        %s198 = ssub.s32 %s22, 1
        // Predicated region
        $region13: #{tpu_custom_call.1} parent=11 // pred_check
          %p199 = pneg %p95
        $region14: #{tpu_custom_call.1} parent=11 // pred_check_branch
          %201 = sbr.rel (%p199) target = $region16
        $region15: #{tpu_custom_call.1} parent=11 // pred_region
          %s203 = ssub.s32 256, 256
          %204 = vsyncadd [#allocation6], %s203
          %s205 = sshll.u32 [#allocation7], 4
          %s206 = int_to_ptr.vmem [resolvable:$true] %s205
          %211 = dma.hbm_to_vmem [thread:$0]  %s2, 256, %s206, [#allocation6], 64, 64, 4
        $region16: #{tpu_custom_call.1} parent=11 // pred_fallthru
          _
        // Predicated region
        $region17: #{tpu_custom_call.1} parent=11 // pred_check
          %p212 = pneg %p116
        $region18: #{tpu_custom_call.1} parent=11 // pred_check_branch
          %214 = sbr.rel (%p212) target = $region20
        $region19: #{tpu_custom_call.1} parent=11 // pred_region
          %s216 = ssub.s32 512, 512
          %217 = vsyncadd [#allocation9], %s216
          %s218 = sshll.u32 [#allocation8], 4
          %s219 = int_to_ptr.vmem [resolvable:$true] %s218
          %224 = dma.hbm_to_vmem [thread:$0]  %s3, 512, %s219, [#allocation9], 64, 64, 4
        $region20: #{tpu_custom_call.1} parent=11 // pred_fallthru
          _
        // Predicated region
        $region21: #{tpu_custom_call.1} parent=11 // pred_check
          %p225 = pneg %p137
        $region22: #{tpu_custom_call.1} parent=11 // pred_check_branch
          %227 = sbr.rel (%p225) target = $region24
        $region23: #{tpu_custom_call.1} parent=11 // pred_region
          _
        $region24: #{tpu_custom_call.1} parent=11 // pred_fallthru
          _
        // Predicated region
        $region25: #{tpu_custom_call.1} parent=11 // pred_check
          %p228 = pneg %p158
        $region26: #{tpu_custom_call.1} parent=11 // pred_check_branch
          %230 = sbr.rel (%p228) target = $region28
        $region27: #{tpu_custom_call.1} parent=11 // pred_region
          _
        $region28: #{tpu_custom_call.1} parent=11 // pred_fallthru
          _
      $region12: #{tpu_custom_call.1} parent=5 // pred_fallthru
        _
      %p231 = scmp.lt.s32.totalorder %s22, 2
      // Predicated region
      $region29: #{tpu_custom_call.1} parent=5 // pred_check
        %p232 = pneg %p231
      $region30: #{tpu_custom_call.1} parent=5 // pred_check_branch
        %234 = sbr.rel (%p232) target = $region32
      $region31: #{tpu_custom_call.1} parent=5 // pred_region
        // Predicated region
        $region33: #{tpu_custom_call.1} parent=31 // pred_check
          %p235 = pneg %p42
        $region34: #{tpu_custom_call.1} parent=31 // pred_check_branch
          %237 = sbr.rel (%p235) target = $region36
        $region35: #{tpu_custom_call.1} parent=31 // pred_region
          %s238 = sand.u32 %s32, 1
          %s239 = scalar_lea.sflag [#allocation3], %s238
          %s240 = sand.u32 %s32, 1
          %s241 = smul.addr %s240, 16
          %s242 = scalar_lea.vmem [#allocation2], %s241
          %s244 = ssub.s32 256, 256
          %245 = vsyncadd %s239, %s244
          %s246 = smul.addr %s22, 2
          %s247 = smul.addr %s246, 128
          %s248 = scalar_lea.hbm %s0, %s247
          %s249 = sshll.u32 %s242, 4
          %s250 = int_to_ptr.vmem [resolvable:$true] %s249
          %255 = dma.hbm_to_vmem [thread:$0]  %s248, 256, %s250, %s239, 128, 128, 8
        $region36: #{tpu_custom_call.1} parent=31 // pred_fallthru
          _
        // Predicated region
        $region37: #{tpu_custom_call.1} parent=31 // pred_check
          %p256 = pneg %p68
        $region38: #{tpu_custom_call.1} parent=31 // pred_check_branch
          %258 = sbr.rel (%p256) target = $region40
        $region39: #{tpu_custom_call.1} parent=31 // pred_region
          %s259 = sand.u32 %s22, 1
          %s260 = scalar_lea.sflag [#allocation6], %s259
          %s261 = sand.u32 %s58, 1
          %s262 = smul.addr %s261, 32
          %s263 = scalar_lea.vmem [#allocation5], %s262
          %s265 = ssub.s32 512, 512
          %266 = vsyncadd %s260, %s265
          %s267 = smul.addr %s22, 4
          %s268 = smul.addr %s267, 128
          %s269 = scalar_lea.hbm %s1, %s268
          %s270 = sshll.u32 %s263, 4
          %s271 = int_to_ptr.vmem [resolvable:$true] %s270
          %276 = dma.hbm_to_vmem [thread:$0]  %s269, 512, %s271, %s260, 128, 128, 8
        $region40: #{tpu_custom_call.1} parent=31 // pred_fallthru
          _
      $region32: #{tpu_custom_call.1} parent=5 // pred_fallthru
        _
      %p277 = scmp.le.s32.totalorder 1, %s22
      %p278 = scmp.lt.s32.totalorder %s22, 3
      %p279 = pnand %p277, %p278
      %p280 = pneg %p279
      // Predicated region
      $region41: #{tpu_custom_call.1} parent=5 // pred_check
        _
      $region42: #{tpu_custom_call.1} parent=5 // pred_check_branch
        %282 = sbr.rel (%p279) target = $region44
      $region43: #{tpu_custom_call.1} parent=5 // pred_region
        %s283 = ssub.s32 %s22, 1
        %s284 = sand.u32 %s35, 1
        %s285 = scalar_lea.sflag [#allocation3], %s284
        %s286 = sand.u32 %s35, 1
        %s287 = smul.addr %s286, 16
        %s288 = scalar_lea.vmem [#allocation2], %s287
        // Predicated region
        $region45: #{tpu_custom_call.1} parent=43 // pred_check
          %p289 = pneg %p48
        $region46: #{tpu_custom_call.1} parent=43 // pred_check_branch
          %291 = sbr.rel (%p289) target = $region48
        $region47: #{tpu_custom_call.1} parent=43 // pred_region
          %292 = dma.done %s285, 256
        $region48: #{tpu_custom_call.1} parent=43 // pred_fallthru
          _
        %s293 = sand.u32 %s27, 1
        %s294 = scalar_lea.sflag [#allocation6], %s293
        %s295 = sand.u32 %s61, 1
        %s296 = smul.addr %s295, 32
        %s297 = scalar_lea.vmem [#allocation5], %s296
        // Predicated region
        $region49: #{tpu_custom_call.1} parent=43 // pred_check
          %p298 = pneg %p74
        $region50: #{tpu_custom_call.1} parent=43 // pred_check_branch
          %300 = sbr.rel (%p298) target = $region52
        $region51: #{tpu_custom_call.1} parent=43 // pred_region
          %301 = dma.done %s294, 512
        $region52: #{tpu_custom_call.1} parent=43 // pred_fallthru
          _
        // Predicated region
        $region53: #{tpu_custom_call.1} parent=43 // pred_check
          %p302 = pneg %p95
        $region54: #{tpu_custom_call.1} parent=43 // pred_check_branch
          %304 = sbr.rel (%p302) target = $region56
        $region55: #{tpu_custom_call.1} parent=43 // pred_region
          %305 = dma.done [#allocation6], 256
        $region56: #{tpu_custom_call.1} parent=43 // pred_fallthru
          _
        // Predicated region
        $region57: #{tpu_custom_call.1} parent=43 // pred_check
          %p306 = pneg %p116
        $region58: #{tpu_custom_call.1} parent=43 // pred_check_branch
          %308 = sbr.rel (%p306) target = $region60
        $region59: #{tpu_custom_call.1} parent=43 // pred_region
          %309 = dma.done [#allocation9], 512
        $region60: #{tpu_custom_call.1} parent=43 // pred_fallthru
          _
        %s310 = sand.u32 %s35, 1
        %s311 = scalar_lea.sflag [#allocation3], %s310
        %s312 = sand.u32 %s35, 1
        %s313 = smul.addr %s312, 16
        %s314 = scalar_lea.vmem [#allocation2], %s313
        %p315 = pneg %p48
        %p316 = pneg %p45
        %s317 = sand.u32 %s27, 1
        %s318 = scalar_lea.sflag [#allocation6], %s317
        %s319 = sand.u32 %s61, 1
        %s320 = smul.addr %s319, 32
        %s321 = scalar_lea.vmem [#allocation5], %s320
        %p322 = pneg %p74
        %p323 = pneg %p71
        %p324 = pneg %p95
        %p325 = pneg %p92
        %p326 = pneg %p116
        %p327 = pneg %p113
        %p328 = pneg %p137
        %p329 = pneg %p134
        %p330 = pneg %p158
        %p331 = pneg %p155
        %p332 = pneg %p184
        %p333 = pneg %p181
        %s334 = sand.u32 %s171, 1
        %s335 = scalar_lea.sflag [#allocation4], %s334
        %s336 = sand.u32 %s171, 1
        %s337 = smul.addr %s336, 16
        %s338 = scalar_lea.vmem [#allocation10], %s337
        %v340 = vld [vmem:[%s288] sm:$0xff]
        %v341 = vld [vmem:[%s288 + $0x8] sm:$0xff]
        %v342 = vld [vmem:[%s297] sm:$0xff]
        %v343 = vld [vmem:[%s297 + $0x8] sm:$0xff]
        %v344 = vld [vmem:[%s297 + $0x10] sm:$0xff]
        %v345 = vld [vmem:[%s297 + $0x18] sm:$0xff]
        %v346 = vld [vmem:[#allocation7] sm:$0xf]
        %v347 = vld [vmem:[#allocation7 + $0x4] sm:$0xf]
        %v348 = vld [vmem:[%s4] sm:$0x3]
        %v349 = vpack.c.bf16 %v341, %v340
        %v352 = vunpack.c.l.b16 %v346
        %v353 = vunpack.c.l.b16 %v347
        %v354 = vpack.c.b16 %v353, %v352
        %vm356 = vcmask 130048
        %v358 = vsel %vm356, %v349, 0
        %360 = vmatprep.subr.bf16.mxu0 0
        %361 = vmatpush1.bf16.msra.mxu0 %v354
        %362 = vmatprep.subr.bf16.mxu0 0
        %363 = vmatpush1.bf16.msra.mxu0 0
        %364 = vmatprep.subr.bf16.mxu0 0
        %365 = vmatpush1.bf16.msra.mxu0 0
        %366 = vmatprep.subr.bf16.mxu0 0
        %367 = vmatpush1.bf16.msra.mxu0 0
        %368 = vmatprep.subr.bf16.mxu0 0
        %369 = vmatpush1.bf16.msra.mxu0 0
        %370 = vmatprep.subr.bf16.mxu0 0
        %371 = vmatpush1.bf16.msra.mxu0 0
        %372 = vmatprep.subr.bf16.mxu0 0
        %373 = vmatpush1.bf16.msra.mxu0 0
        %374 = vmatprep.subr.bf16.mxu0 0
        %375 = vmatpush1.bf16.msra.mxu0 0
        %376 = vmatprep.subr.bf16.mxu0 0
        %377 = vmatpush1.bf16.msra.mxu0 0
        %378 = vmatprep.subr.bf16.mxu0 0
        %379 = vmatpush1.bf16.msra.mxu0 0
        %380 = vmatprep.subr.bf16.mxu0 0
        %381 = vmatpush1.bf16.msra.mxu0 0
        %382 = vmatprep.subr.bf16.mxu0 0
        %383 = vmatpush1.bf16.msra.mxu0 0
        %384 = vmatprep.subr.bf16.mxu0 0
        %385 = vmatpush1.bf16.msra.mxu0 0
        %386 = vmatprep.subr.bf16.mxu0 0
        %387 = vmatpush1.bf16.msra.mxu0 0
        %388 = vmatprep.subr.bf16.mxu0 0
        %389 = vmatpush1.bf16.msra.mxu0 0
        %390 = vmatprep.subr.bf16.mxu0 0
        %391 = vmatpush1.bf16.msra.mxu0 0
        %392 = vmatprep.mubr.bf16.mxu0 0
        %393 = vmatmul.mubr.bf16.gmra.mrb[0].mxu0 %v358
        %v394 = vpop.f32.mrb[0].mxu0
        %v395 = vadd.f32 0.0, %v394
        %v396 = vpop.f32.mrb[0].mxu0
        %v397 = vpop.f32.mrb[0].mxu0
        %v398 = vadd.f32 0.0, %v397
        %v399 = vpop.f32.mrb[0].mxu0
        %400 = vdwg.mxu0
        %v401 = vpack.c.bf16 %v348, %v348
        %v403 = vsel %vm356, %v401, 0
        %405 = vmatprep.subr.bf16.mxu0 0
        %406 = vmatpush1.bf16.xpose.msra.mxu0 %v358
        %407 = vmatprep.subr.bf16.mxu0 0
        %408 = vmatpush1.bf16.xpose.msra.mxu0 0
        %409 = vmatprep.subr.bf16.mxu0 0
        %410 = vmatpush1.bf16.xpose.msra.mxu0 0
        %411 = vmatprep.subr.bf16.mxu0 0
        %412 = vmatpush1.bf16.xpose.msra.mxu0 0
        %413 = vmatprep.subr.bf16.mxu0 0
        %414 = vmatpush1.bf16.xpose.msra.mxu0 0
        %415 = vmatprep.subr.bf16.mxu0 0
        %416 = vmatpush1.bf16.xpose.msra.mxu0 0
        %417 = vmatprep.subr.bf16.mxu0 0
        %418 = vmatpush1.bf16.xpose.msra.mxu0 0
        %419 = vmatprep.subr.bf16.mxu0 0
        %420 = vmatpush1.bf16.xpose.msra.mxu0 0
        %421 = vmatprep.subr.bf16.mxu0 0
        %422 = vmatpush1.bf16.xpose.msra.mxu0 0
        %423 = vmatprep.subr.bf16.mxu0 0
        %424 = vmatpush1.bf16.xpose.msra.mxu0 0
        %425 = vmatprep.subr.bf16.mxu0 0
        %426 = vmatpush1.bf16.xpose.msra.mxu0 0
        %427 = vmatprep.subr.bf16.mxu0 0
        %428 = vmatpush1.bf16.xpose.msra.mxu0 0
        %429 = vmatprep.subr.bf16.mxu0 0
        %430 = vmatpush1.bf16.xpose.msra.mxu0 0
        %431 = vmatprep.subr.bf16.mxu0 0
        %432 = vmatpush1.bf16.xpose.msra.mxu0 0
        %433 = vmatprep.subr.bf16.mxu0 0
        %434 = vmatpush1.bf16.xpose.msra.mxu0 0
        %435 = vmatprep.subr.bf16.mxu0 0
        %436 = vmatpush1.bf16.xpose.msra.mxu0 0
        %437 = vmatprep.mubr.bf16.mxu0 0
        %438 = vmatmul.mubr.bf16.gmra.mrb[0].mxu0 %v403
        %v439 = vpop.f32.mrb[0].mxu0
        %v440 = vadd.f32 0.0, %v439
        %v441 = vpop.f32.mrb[0].mxu0
        %v442 = vpop.f32.mrb[0].mxu0
        %v443 = vpop.f32.mrb[0].mxu0
        %444 = vdwg.mxu0
        %446 = vset.pattern.permute.xlu0 32
        %447 = vperm.xlu0 %446, %v395
        %v448 = vpop.permute.xlu0 %447
        %451 = vset.pattern.permute.xlu0 32
        %452 = vperm.xlu0 %451, %v398
        %v453 = vpop.permute.xlu0 %452
        %v455 = vlaneseq
        %v456 = vshrl.u32 %v455, 7
        %v457 = vsub.s32 0, %v456
        %v458 = vrot.slane %v440, %v457
        %v459 = vadd.f32 %v448, %v458
        %v460 = vadd.f32 %v453, %v458
        %v461 = vmul.f32 %v459, 0.2
        %v462 = vmul.f32 %v460, 0.2
        %v463 = vmax.f32 %v459, %v461
        %v464 = vmax.f32 %v460, %v462
        %v465 = vadd.f32 %v463, %v342
        %v466 = vadd.f32 %v464, %v343
        %v467 = vsel %vm356, %v465, -inf
        %468 = vmax.xlane.f32.xlu0 %v467
        %v469 = vpop.xlane.xlu0 %468
        %v470 = vsel %vm356, %v466, -inf
        %471 = vmax.xlane.f32.xlu0 %v470
        %v472 = vpop.xlane.xlu0 %471
        %v473 = vsub.f32 %v465, %v469
        %v474 = vsub.f32 %v466, %v472
        %v475 = vmul.f32 %v473, 1.442695
        %v476 = vpow.pop %v475
        %v477 = vmul.f32 %v474, 1.442695
        %v478 = vpow.pop %v477
        %v479 = vsel %vm356, %v476, 0.0
        %480 = vadd.xlane.f32.xlu0 %v479
        %v481 = vpop.xlane.xlu0 %480
        %v482 = vsel %vm356, %v478, 0.0
        %483 = vadd.xlane.f32.xlu0 %v482
        %v484 = vpop.xlane.xlu0 %483
        %v485 = vrcp.pop %v481
        %v486 = vrcp.pop %v484
        %v487 = vmul.f32 %v476, %v485
        %v488 = vmul.f32 %v478, %v486
        %v489 = vpack.c.bf16 %v488, %v487
        %v490 = vpack.c.bf16 %v398, %v395
        %v491 = vlaneseq
        %v492 = vshrl.u32 %v491, 7
        %v493 = vsub.s32 1, %v492
        %v494 = vrot.slane %v348, %v493
        %v496 = vsel %vm356, %v489, 0
        %498 = vmatprep.subr.bf16.mxu0 0
        %499 = vmatpush1.bf16.msra.mxu0 %v490
        %500 = vmatprep.subr.bf16.mxu0 0
        %501 = vmatpush1.bf16.msra.mxu0 0
        %502 = vmatprep.subr.bf16.mxu0 0
        %503 = vmatpush1.bf16.msra.mxu0 0
        %504 = vmatprep.subr.bf16.mxu0 0
        %505 = vmatpush1.bf16.msra.mxu0 0
        %506 = vmatprep.subr.bf16.mxu0 0
        %507 = vmatpush1.bf16.msra.mxu0 0
        %508 = vmatprep.subr.bf16.mxu0 0
        %509 = vmatpush1.bf16.msra.mxu0 0
        %510 = vmatprep.subr.bf16.mxu0 0
        %511 = vmatpush1.bf16.msra.mxu0 0
        %512 = vmatprep.subr.bf16.mxu0 0
        %513 = vmatpush1.bf16.msra.mxu0 0
        %514 = vmatprep.subr.bf16.mxu0 0
        %515 = vmatpush1.bf16.msra.mxu0 0
        %516 = vmatprep.subr.bf16.mxu0 0
        %517 = vmatpush1.bf16.msra.mxu0 0
        %518 = vmatprep.subr.bf16.mxu0 0
        %519 = vmatpush1.bf16.msra.mxu0 0
        %520 = vmatprep.subr.bf16.mxu0 0
        %521 = vmatpush1.bf16.msra.mxu0 0
        %522 = vmatprep.subr.bf16.mxu0 0
        %523 = vmatpush1.bf16.msra.mxu0 0
        %524 = vmatprep.subr.bf16.mxu0 0
        %525 = vmatpush1.bf16.msra.mxu0 0
        %526 = vmatprep.subr.bf16.mxu0 0
        %527 = vmatpush1.bf16.msra.mxu0 0
        %528 = vmatprep.subr.bf16.mxu0 0
        %529 = vmatpush1.bf16.msra.mxu0 0
        %530 = vmatprep.mubr.bf16.mxu0 0
        %531 = vmatmul.mubr.bf16.gmra.mrb[0].mxu0 %v496
        %v532 = vpop.f32.mrb[0].mxu0
        %v533 = vadd.f32 %v494, %v532
        %v534 = vpop.f32.mrb[0].mxu0
        %v535 = vpop.f32.mrb[0].mxu0
        %v536 = vadd.f32 %v494, %v535
        %v537 = vpop.f32.mrb[0].mxu0
        %538 = vdwg.mxu0
        %v539 = vmax.f32 %v533, 0.0
        %v540 = vmax.f32 %v536, 0.0
        %v541 = vld [vmem:[#allocation8] sm:$0xf]
        %v542 = vld [vmem:[#allocation8 + $0x4] sm:$0xf]
        %v543 = vld [vmem:[#allocation8 + $0x8] sm:$0xf]
        %v544 = vld [vmem:[#allocation8 + $0xc] sm:$0xf]
        %v545 = vld [vmem:[%s5] sm:$0x3]
        %v546 = vpack.c.bf16 %v540, %v539
        %v551 = vunpack.c.l.b16 %v541
        %v552 = vunpack.c.l.b16 %v542
        %v553 = vunpack.c.l.b16 %v543
        %v554 = vunpack.c.l.b16 %v544
        %v555 = vpack.c.b16 %v552, %v551
        %v556 = vpack.c.b16 %v554, %v553
        %vm559 = vcmask 261120
        %v561 = vsel %vm559, %v546, 0
        %563 = vmatprep.subr.bf16.mxu0 0
        %564 = vmatpush1.bf16.msra.mxu0 %v555
        %565 = vmatprep.subr.bf16.mxu0 0
        %566 = vmatpush1.bf16.msra.mxu0 %v556
        %567 = vmatprep.subr.bf16.mxu0 0
        %568 = vmatpush1.bf16.msra.mxu0 0
        %569 = vmatprep.subr.bf16.mxu0 0
        %570 = vmatpush1.bf16.msra.mxu0 0
        %571 = vmatprep.subr.bf16.mxu0 0
        %572 = vmatpush1.bf16.msra.mxu0 0
        %573 = vmatprep.subr.bf16.mxu0 0
        %574 = vmatpush1.bf16.msra.mxu0 0
        %575 = vmatprep.subr.bf16.mxu0 0
        %576 = vmatpush1.bf16.msra.mxu0 0
        %577 = vmatprep.subr.bf16.mxu0 0
        %578 = vmatpush1.bf16.msra.mxu0 0
        %579 = vmatprep.subr.bf16.mxu0 0
        %580 = vmatpush1.bf16.msra.mxu0 0
        %581 = vmatprep.subr.bf16.mxu0 0
        %582 = vmatpush1.bf16.msra.mxu0 0
        %583 = vmatprep.subr.bf16.mxu0 0
        %584 = vmatpush1.bf16.msra.mxu0 0
        %585 = vmatprep.subr.bf16.mxu0 0
        %586 = vmatpush1.bf16.msra.mxu0 0
        %587 = vmatprep.subr.bf16.mxu0 0
        %588 = vmatpush1.bf16.msra.mxu0 0
        %589 = vmatprep.subr.bf16.mxu0 0
        %590 = vmatpush1.bf16.msra.mxu0 0
        %591 = vmatprep.subr.bf16.mxu0 0
        %592 = vmatpush1.bf16.msra.mxu0 0
        %593 = vmatprep.subr.bf16.mxu0 0
        %594 = vmatpush1.bf16.msra.mxu0 0
        %595 = vmatprep.mubr.bf16.mxu0 0
        %596 = vmatmul.mubr.bf16.gmra.mrb[0].mxu0 %v561
        %v597 = vpop.f32.mrb[0].mxu0
        %v598 = vadd.f32 0.0, %v597
        %v599 = vpop.f32.mrb[0].mxu0
        %v600 = vpop.f32.mrb[0].mxu0
        %v601 = vadd.f32 0.0, %v600
        %v602 = vpop.f32.mrb[0].mxu0
        %603 = vdwg.mxu0
        %v604 = vpack.c.bf16 %v545, %v545
        %v606 = vsel %vm559, %v604, 0
        %608 = vmatprep.subr.bf16.mxu0 0
        %609 = vmatpush1.bf16.xpose.msra.mxu0 %v561
        %610 = vmatprep.subr.bf16.mxu0 0
        %611 = vmatpush1.bf16.xpose.msra.mxu0 0
        %612 = vmatprep.subr.bf16.mxu0 0
        %613 = vmatpush1.bf16.xpose.msra.mxu0 0
        %614 = vmatprep.subr.bf16.mxu0 0
        %615 = vmatpush1.bf16.xpose.msra.mxu0 0
        %616 = vmatprep.subr.bf16.mxu0 0
        %617 = vmatpush1.bf16.xpose.msra.mxu0 0
        %618 = vmatprep.subr.bf16.mxu0 0
        %619 = vmatpush1.bf16.xpose.msra.mxu0 0
        %620 = vmatprep.subr.bf16.mxu0 0
        %621 = vmatpush1.bf16.xpose.msra.mxu0 0
        %622 = vmatprep.subr.bf16.mxu0 0
        %623 = vmatpush1.bf16.xpose.msra.mxu0 0
        %624 = vmatprep.subr.bf16.mxu0 0
        %625 = vmatpush1.bf16.xpose.msra.mxu0 0
        %626 = vmatprep.subr.bf16.mxu0 0
        %627 = vmatpush1.bf16.xpose.msra.mxu0 0
        %628 = vmatprep.subr.bf16.mxu0 0
        %629 = vmatpush1.bf16.xpose.msra.mxu0 0
        %630 = vmatprep.subr.bf16.mxu0 0
        %631 = vmatpush1.bf16.xpose.msra.mxu0 0
        %632 = vmatprep.subr.bf16.mxu0 0
        %633 = vmatpush1.bf16.xpose.msra.mxu0 0
        %634 = vmatprep.subr.bf16.mxu0 0
        %635 = vmatpush1.bf16.xpose.msra.mxu0 0
        %636 = vmatprep.subr.bf16.mxu0 0
        %637 = vmatpush1.bf16.xpose.msra.mxu0 0
        %638 = vmatprep.subr.bf16.mxu0 0
        %639 = vmatpush1.bf16.xpose.msra.mxu0 0
        %640 = vmatprep.mubr.bf16.mxu0 0
        %641 = vmatmul.mubr.bf16.gmra.mrb[0].mxu0 %v606
        %v642 = vpop.f32.mrb[0].mxu0
        %v643 = vadd.f32 0.0, %v642
        %v644 = vpop.f32.mrb[0].mxu0
        %v645 = vpop.f32.mrb[0].mxu0
        %v646 = vpop.f32.mrb[0].mxu0
        %647 = vdwg.mxu0
        %649 = vset.pattern.permute.xlu0 32
        %650 = vperm.xlu0 %649, %v598
        %v651 = vpop.permute.xlu0 %650
        %654 = vset.pattern.permute.xlu0 32
        %655 = vperm.xlu0 %654, %v601
        %v656 = vpop.permute.xlu0 %655
        %v658 = vlaneseq
        %v659 = vshrl.u32 %v658, 7
        %v660 = vsub.s32 0, %v659
        %v661 = vrot.slane %v643, %v660
        %v662 = vadd.f32 %v651, %v661
        %v663 = vadd.f32 %v656, %v661
        %v664 = vmul.f32 %v662, 0.2
        %v665 = vmul.f32 %v663, 0.2
        %v666 = vmax.f32 %v662, %v664
        %v667 = vmax.f32 %v663, %v665
        %v668 = vadd.f32 %v666, %v342
        %v669 = vadd.f32 %v667, %v343
        %v670 = vsel %vm356, %v668, -inf
        %671 = vmax.xlane.f32.xlu0 %v670
        %v672 = vpop.xlane.xlu0 %671
        %v673 = vsel %vm356, %v669, -inf
        %674 = vmax.xlane.f32.xlu0 %v673
        %v675 = vpop.xlane.xlu0 %674
        %v676 = vsub.f32 %v668, %v672
        %v677 = vsub.f32 %v669, %v675
        %v678 = vmul.f32 %v676, 1.442695
        %v679 = vpow.pop %v678
        %v680 = vmul.f32 %v677, 1.442695
        %v681 = vpow.pop %v680
        %v682 = vsel %vm356, %v679, 0.0
        %683 = vadd.xlane.f32.xlu0 %v682
        %v684 = vpop.xlane.xlu0 %683
        %v685 = vsel %vm356, %v681, 0.0
        %686 = vadd.xlane.f32.xlu0 %v685
        %v687 = vpop.xlane.xlu0 %686
        %v688 = vrcp.pop %v684
        %v689 = vrcp.pop %v687
        %v690 = vmul.f32 %v679, %v688
        %v691 = vmul.f32 %v681, %v689
        %v692 = vpack.c.bf16 %v691, %v690
        %v693 = vpack.c.bf16 %v601, %v598
        %v694 = vlaneseq
        %v695 = vshrl.u32 %v694, 7
        %v696 = vsub.s32 1, %v695
        %v697 = vrot.slane %v545, %v696
        %v699 = vsel %vm356, %v692, 0
        %701 = vmatprep.subr.bf16.mxu0 0
        %702 = vmatpush1.bf16.msra.mxu0 %v693
        %703 = vmatprep.subr.bf16.mxu0 0
        %704 = vmatpush1.bf16.msra.mxu0 0
        %705 = vmatprep.subr.bf16.mxu0 0
        %706 = vmatpush1.bf16.msra.mxu0 0
        %707 = vmatprep.subr.bf16.mxu0 0
        %708 = vmatpush1.bf16.msra.mxu0 0
        %709 = vmatprep.subr.bf16.mxu0 0
        %710 = vmatpush1.bf16.msra.mxu0 0
        %711 = vmatprep.subr.bf16.mxu0 0
        %712 = vmatpush1.bf16.msra.mxu0 0
        %713 = vmatprep.subr.bf16.mxu0 0
        %714 = vmatpush1.bf16.msra.mxu0 0
        %715 = vmatprep.subr.bf16.mxu0 0
        %716 = vmatpush1.bf16.msra.mxu0 0
        %717 = vmatprep.subr.bf16.mxu0 0
        %718 = vmatpush1.bf16.msra.mxu0 0
        %719 = vmatprep.subr.bf16.mxu0 0
        %720 = vmatpush1.bf16.msra.mxu0 0
        %721 = vmatprep.subr.bf16.mxu0 0
        %722 = vmatpush1.bf16.msra.mxu0 0
        %723 = vmatprep.subr.bf16.mxu0 0
        %724 = vmatpush1.bf16.msra.mxu0 0
        %725 = vmatprep.subr.bf16.mxu0 0
        %726 = vmatpush1.bf16.msra.mxu0 0
        %727 = vmatprep.subr.bf16.mxu0 0
        %728 = vmatpush1.bf16.msra.mxu0 0
        %729 = vmatprep.subr.bf16.mxu0 0
        %730 = vmatpush1.bf16.msra.mxu0 0
        %731 = vmatprep.subr.bf16.mxu0 0
        %732 = vmatpush1.bf16.msra.mxu0 0
        %733 = vmatprep.mubr.bf16.mxu0 0
        %734 = vmatmul.mubr.bf16.gmra.mrb[0].mxu0 %v699
        %v735 = vpop.f32.mrb[0].mxu0
        %v736 = vadd.f32 %v697, %v735
        %v737 = vpop.f32.mrb[0].mxu0
        %v738 = vpop.f32.mrb[0].mxu0
        %v739 = vadd.f32 %v697, %v738
        %v740 = vpop.f32.mrb[0].mxu0
        %741 = vdwg.mxu0
        %v742 = vmax.f32 %v736, 0.0
        %v743 = vmax.f32 %v739, 0.0
        %s744 = scalar_lea.vmem [#allocation7], 8
        %v745 = vld [vmem:[%s744] sm:$0xf]
        %v746 = vld [vmem:[%s744 + $0x4] sm:$0xf]
        %s747 = scalar_lea.vmem %s4, 2
        %v748 = vld [vmem:[%s747] sm:$0x3]
        %v751 = vunpack.c.l.b16 %v745
        %v752 = vunpack.c.l.b16 %v746
        %v753 = vpack.c.b16 %v752, %v751
        %755 = vmatprep.subr.bf16.mxu0 0
        %756 = vmatpush1.bf16.msra.mxu0 %v753
        %757 = vmatprep.subr.bf16.mxu0 0
        %758 = vmatpush1.bf16.msra.mxu0 0
        %759 = vmatprep.subr.bf16.mxu0 0
        %760 = vmatpush1.bf16.msra.mxu0 0
        %761 = vmatprep.subr.bf16.mxu0 0
        %762 = vmatpush1.bf16.msra.mxu0 0
        %763 = vmatprep.subr.bf16.mxu0 0
        %764 = vmatpush1.bf16.msra.mxu0 0
        %765 = vmatprep.subr.bf16.mxu0 0
        %766 = vmatpush1.bf16.msra.mxu0 0
        %767 = vmatprep.subr.bf16.mxu0 0
        %768 = vmatpush1.bf16.msra.mxu0 0
        %769 = vmatprep.subr.bf16.mxu0 0
        %770 = vmatpush1.bf16.msra.mxu0 0
        %771 = vmatprep.subr.bf16.mxu0 0
        %772 = vmatpush1.bf16.msra.mxu0 0
        %773 = vmatprep.subr.bf16.mxu0 0
        %774 = vmatpush1.bf16.msra.mxu0 0
        %775 = vmatprep.subr.bf16.mxu0 0
        %776 = vmatpush1.bf16.msra.mxu0 0
        %777 = vmatprep.subr.bf16.mxu0 0
        %778 = vmatpush1.bf16.msra.mxu0 0
        %779 = vmatprep.subr.bf16.mxu0 0
        %780 = vmatpush1.bf16.msra.mxu0 0
        %781 = vmatprep.subr.bf16.mxu0 0
        %782 = vmatpush1.bf16.msra.mxu0 0
        %783 = vmatprep.subr.bf16.mxu0 0
        %784 = vmatpush1.bf16.msra.mxu0 0
        %785 = vmatprep.subr.bf16.mxu0 0
        %786 = vmatpush1.bf16.msra.mxu0 0
        %787 = vmatprep.mubr.bf16.mxu0 0
        %788 = vmatmul.mubr.bf16.gmra.mrb[0].mxu0 %v358
        %v789 = vpop.f32.mrb[0].mxu0
        %v790 = vadd.f32 0.0, %v789
        %v791 = vpop.f32.mrb[0].mxu0
        %v792 = vpop.f32.mrb[0].mxu0
        %v793 = vadd.f32 0.0, %v792
        %v794 = vpop.f32.mrb[0].mxu0
        %795 = vdwg.mxu0
        %v796 = vpack.c.bf16 %v748, %v748
        %v798 = vsel %vm356, %v796, 0
        %800 = vmatprep.subr.bf16.mxu0 0
        %801 = vmatpush1.bf16.xpose.msra.mxu0 %v358
        %802 = vmatprep.subr.bf16.mxu0 0
        %803 = vmatpush1.bf16.xpose.msra.mxu0 0
        %804 = vmatprep.subr.bf16.mxu0 0
        %805 = vmatpush1.bf16.xpose.msra.mxu0 0
        %806 = vmatprep.subr.bf16.mxu0 0
        %807 = vmatpush1.bf16.xpose.msra.mxu0 0
        %808 = vmatprep.subr.bf16.mxu0 0
        %809 = vmatpush1.bf16.xpose.msra.mxu0 0
        %810 = vmatprep.subr.bf16.mxu0 0
        %811 = vmatpush1.bf16.xpose.msra.mxu0 0
        %812 = vmatprep.subr.bf16.mxu0 0
        %813 = vmatpush1.bf16.xpose.msra.mxu0 0
        %814 = vmatprep.subr.bf16.mxu0 0
        %815 = vmatpush1.bf16.xpose.msra.mxu0 0
        %816 = vmatprep.subr.bf16.mxu0 0
        %817 = vmatpush1.bf16.xpose.msra.mxu0 0
        %818 = vmatprep.subr.bf16.mxu0 0
        %819 = vmatpush1.bf16.xpose.msra.mxu0 0
        %820 = vmatprep.subr.bf16.mxu0 0
        %821 = vmatpush1.bf16.xpose.msra.mxu0 0
        %822 = vmatprep.subr.bf16.mxu0 0
        %823 = vmatpush1.bf16.xpose.msra.mxu0 0
        %824 = vmatprep.subr.bf16.mxu0 0
        %825 = vmatpush1.bf16.xpose.msra.mxu0 0
        %826 = vmatprep.subr.bf16.mxu0 0
        %827 = vmatpush1.bf16.xpose.msra.mxu0 0
        %828 = vmatprep.subr.bf16.mxu0 0
        %829 = vmatpush1.bf16.xpose.msra.mxu0 0
        %830 = vmatprep.subr.bf16.mxu0 0
        %831 = vmatpush1.bf16.xpose.msra.mxu0 0
        %832 = vmatprep.mubr.bf16.mxu0 0
        %833 = vmatmul.mubr.bf16.gmra.mrb[0].mxu0 %v798
        %v834 = vpop.f32.mrb[0].mxu0
        %v835 = vadd.f32 0.0, %v834
        %v836 = vpop.f32.mrb[0].mxu0
        %v837 = vpop.f32.mrb[0].mxu0
        %v838 = vpop.f32.mrb[0].mxu0
        %839 = vdwg.mxu0
        %841 = vset.pattern.permute.xlu0 32
        %842 = vperm.xlu0 %841, %v790
        %v843 = vpop.permute.xlu0 %842
        %846 = vset.pattern.permute.xlu0 32
        %847 = vperm.xlu0 %846, %v793
        %v848 = vpop.permute.xlu0 %847
        %v850 = vlaneseq
        %v851 = vshrl.u32 %v850, 7
        %v852 = vsub.s32 0, %v851
        %v853 = vrot.slane %v835, %v852
        %v854 = vadd.f32 %v843, %v853
        %v855 = vadd.f32 %v848, %v853
        %v856 = vmul.f32 %v854, 0.2
        %v857 = vmul.f32 %v855, 0.2
        %v858 = vmax.f32 %v854, %v856
        %v859 = vmax.f32 %v855, %v857
        %v860 = vadd.f32 %v858, %v344
        %v861 = vadd.f32 %v859, %v345
        %v862 = vsel %vm356, %v860, -inf
        %863 = vmax.xlane.f32.xlu0 %v862
        %v864 = vpop.xlane.xlu0 %863
        %v865 = vsel %vm356, %v861, -inf
        %866 = vmax.xlane.f32.xlu0 %v865
        %v867 = vpop.xlane.xlu0 %866
        %v868 = vsub.f32 %v860, %v864
        %v869 = vsub.f32 %v861, %v867
        %v870 = vmul.f32 %v868, 1.442695
        %v871 = vpow.pop %v870
        %v872 = vmul.f32 %v869, 1.442695
        %v873 = vpow.pop %v872
        %v874 = vsel %vm356, %v871, 0.0
        %875 = vadd.xlane.f32.xlu0 %v874
        %v876 = vpop.xlane.xlu0 %875
        %v877 = vsel %vm356, %v873, 0.0
        %878 = vadd.xlane.f32.xlu0 %v877
        %v879 = vpop.xlane.xlu0 %878
        %v880 = vrcp.pop %v876
        %v881 = vrcp.pop %v879
        %v882 = vmul.f32 %v871, %v880
        %v883 = vmul.f32 %v873, %v881
        %v884 = vpack.c.bf16 %v883, %v882
        %v885 = vpack.c.bf16 %v793, %v790
        %v886 = vlaneseq
        %v887 = vshrl.u32 %v886, 7
        %v888 = vsub.s32 1, %v887
        %v889 = vrot.slane %v748, %v888
        %v891 = vsel %vm356, %v884, 0
        %893 = vmatprep.subr.bf16.mxu0 0
        %894 = vmatpush1.bf16.msra.mxu0 %v885
        %895 = vmatprep.subr.bf16.mxu0 0
        %896 = vmatpush1.bf16.msra.mxu0 0
        %897 = vmatprep.subr.bf16.mxu0 0
        %898 = vmatpush1.bf16.msra.mxu0 0
        %899 = vmatprep.subr.bf16.mxu0 0
        %900 = vmatpush1.bf16.msra.mxu0 0
        %901 = vmatprep.subr.bf16.mxu0 0
        %902 = vmatpush1.bf16.msra.mxu0 0
        %903 = vmatprep.subr.bf16.mxu0 0
        %904 = vmatpush1.bf16.msra.mxu0 0
        %905 = vmatprep.subr.bf16.mxu0 0
        %906 = vmatpush1.bf16.msra.mxu0 0
        %907 = vmatprep.subr.bf16.mxu0 0
        %908 = vmatpush1.bf16.msra.mxu0 0
        %909 = vmatprep.subr.bf16.mxu0 0
        %910 = vmatpush1.bf16.msra.mxu0 0
        %911 = vmatprep.subr.bf16.mxu0 0
        %912 = vmatpush1.bf16.msra.mxu0 0
        %913 = vmatprep.subr.bf16.mxu0 0
        %914 = vmatpush1.bf16.msra.mxu0 0
        %915 = vmatprep.subr.bf16.mxu0 0
        %916 = vmatpush1.bf16.msra.mxu0 0
        %917 = vmatprep.subr.bf16.mxu0 0
        %918 = vmatpush1.bf16.msra.mxu0 0
        %919 = vmatprep.subr.bf16.mxu0 0
        %920 = vmatpush1.bf16.msra.mxu0 0
        %921 = vmatprep.subr.bf16.mxu0 0
        %922 = vmatpush1.bf16.msra.mxu0 0
        %923 = vmatprep.subr.bf16.mxu0 0
        %924 = vmatpush1.bf16.msra.mxu0 0
        %925 = vmatprep.mubr.bf16.mxu0 0
        %926 = vmatmul.mubr.bf16.gmra.mrb[0].mxu0 %v891
        %v927 = vpop.f32.mrb[0].mxu0
        %v928 = vadd.f32 %v889, %v927
        %v929 = vpop.f32.mrb[0].mxu0
        %v930 = vpop.f32.mrb[0].mxu0
        %v931 = vadd.f32 %v889, %v930
        %v932 = vpop.f32.mrb[0].mxu0
        %933 = vdwg.mxu0
        %v934 = vmax.f32 %v928, 0.0
        %v935 = vmax.f32 %v931, 0.0
        %s936 = scalar_lea.vmem [#allocation8], 16
        %v937 = vld [vmem:[%s936] sm:$0xf]
        %v938 = vld [vmem:[%s936 + $0x4] sm:$0xf]
        %v939 = vld [vmem:[%s936 + $0x8] sm:$0xf]
        %v940 = vld [vmem:[%s936 + $0xc] sm:$0xf]
        %s941 = scalar_lea.vmem %s5, 2
        %v942 = vld [vmem:[%s941] sm:$0x3]
        %v943 = vpack.c.bf16 %v935, %v934
        %v948 = vunpack.c.l.b16 %v937
        %v949 = vunpack.c.l.b16 %v938
        %v950 = vunpack.c.l.b16 %v939
        %v951 = vunpack.c.l.b16 %v940
        %v952 = vpack.c.b16 %v949, %v948
        %v953 = vpack.c.b16 %v951, %v950
        %v957 = vsel %vm559, %v943, 0
        %959 = vmatprep.subr.bf16.mxu0 0
        %960 = vmatpush1.bf16.msra.mxu0 %v952
        %961 = vmatprep.subr.bf16.mxu0 0
        %962 = vmatpush1.bf16.msra.mxu0 %v953
        %963 = vmatprep.subr.bf16.mxu0 0
        %964 = vmatpush1.bf16.msra.mxu0 0
        %965 = vmatprep.subr.bf16.mxu0 0
        %966 = vmatpush1.bf16.msra.mxu0 0
        %967 = vmatprep.subr.bf16.mxu0 0
        %968 = vmatpush1.bf16.msra.mxu0 0
        %969 = vmatprep.subr.bf16.mxu0 0
        %970 = vmatpush1.bf16.msra.mxu0 0
        %971 = vmatprep.subr.bf16.mxu0 0
        %972 = vmatpush1.bf16.msra.mxu0 0
        %973 = vmatprep.subr.bf16.mxu0 0
        %974 = vmatpush1.bf16.msra.mxu0 0
        %975 = vmatprep.subr.bf16.mxu0 0
        %976 = vmatpush1.bf16.msra.mxu0 0
        %977 = vmatprep.subr.bf16.mxu0 0
        %978 = vmatpush1.bf16.msra.mxu0 0
        %979 = vmatprep.subr.bf16.mxu0 0
        %980 = vmatpush1.bf16.msra.mxu0 0
        %981 = vmatprep.subr.bf16.mxu0 0
        %982 = vmatpush1.bf16.msra.mxu0 0
        %983 = vmatprep.subr.bf16.mxu0 0
        %984 = vmatpush1.bf16.msra.mxu0 0
        %985 = vmatprep.subr.bf16.mxu0 0
        %986 = vmatpush1.bf16.msra.mxu0 0
        %987 = vmatprep.subr.bf16.mxu0 0
        %988 = vmatpush1.bf16.msra.mxu0 0
        %989 = vmatprep.subr.bf16.mxu0 0
        %990 = vmatpush1.bf16.msra.mxu0 0
        %991 = vmatprep.mubr.bf16.mxu0 0
        %992 = vmatmul.mubr.bf16.gmra.mrb[0].mxu0 %v957
        %v993 = vpop.f32.mrb[0].mxu0
        %v994 = vadd.f32 0.0, %v993
        %v995 = vpop.f32.mrb[0].mxu0
        %v996 = vpop.f32.mrb[0].mxu0
        %v997 = vadd.f32 0.0, %v996
        %v998 = vpop.f32.mrb[0].mxu0
        %999 = vdwg.mxu0
        %v1000 = vpack.c.bf16 %v942, %v942
        %v1002 = vsel %vm559, %v1000, 0
        %1004 = vmatprep.subr.bf16.mxu0 0
        %1005 = vmatpush1.bf16.xpose.msra.mxu0 %v957
        %1006 = vmatprep.subr.bf16.mxu0 0
        %1007 = vmatpush1.bf16.xpose.msra.mxu0 0
        %1008 = vmatprep.subr.bf16.mxu0 0
        %1009 = vmatpush1.bf16.xpose.msra.mxu0 0
        %1010 = vmatprep.subr.bf16.mxu0 0
        %1011 = vmatpush1.bf16.xpose.msra.mxu0 0
        %1012 = vmatprep.subr.bf16.mxu0 0
        %1013 = vmatpush1.bf16.xpose.msra.mxu0 0
        %1014 = vmatprep.subr.bf16.mxu0 0
        %1015 = vmatpush1.bf16.xpose.msra.mxu0 0
        %1016 = vmatprep.subr.bf16.mxu0 0
        %1017 = vmatpush1.bf16.xpose.msra.mxu0 0
        %1018 = vmatprep.subr.bf16.mxu0 0
        %1019 = vmatpush1.bf16.xpose.msra.mxu0 0
        %1020 = vmatprep.subr.bf16.mxu0 0
        %1021 = vmatpush1.bf16.xpose.msra.mxu0 0
        %1022 = vmatprep.subr.bf16.mxu0 0
        %1023 = vmatpush1.bf16.xpose.msra.mxu0 0
        %1024 = vmatprep.subr.bf16.mxu0 0
        %1025 = vmatpush1.bf16.xpose.msra.mxu0 0
        %1026 = vmatprep.subr.bf16.mxu0 0
        %1027 = vmatpush1.bf16.xpose.msra.mxu0 0
        %1028 = vmatprep.subr.bf16.mxu0 0
        %1029 = vmatpush1.bf16.xpose.msra.mxu0 0
        %1030 = vmatprep.subr.bf16.mxu0 0
        %1031 = vmatpush1.bf16.xpose.msra.mxu0 0
        %1032 = vmatprep.subr.bf16.mxu0 0
        %1033 = vmatpush1.bf16.xpose.msra.mxu0 0
        %1034 = vmatprep.subr.bf16.mxu0 0
        %1035 = vmatpush1.bf16.xpose.msra.mxu0 0
        %1036 = vmatprep.mubr.bf16.mxu0 0
        %1037 = vmatmul.mubr.bf16.gmra.mrb[0].mxu0 %v1002
        %v1038 = vpop.f32.mrb[0].mxu0
        %v1039 = vadd.f32 0.0, %v1038
        %v1040 = vpop.f32.mrb[0].mxu0
        %v1041 = vpop.f32.mrb[0].mxu0
        %v1042 = vpop.f32.mrb[0].mxu0
        %1043 = vdwg.mxu0
        %1045 = vset.pattern.permute.xlu0 32
        %1046 = vperm.xlu0 %1045, %v994
        %v1047 = vpop.permute.xlu0 %1046
        %1050 = vset.pattern.permute.xlu0 32
        %1051 = vperm.xlu0 %1050, %v997
        %v1052 = vpop.permute.xlu0 %1051
        %v1054 = vlaneseq
        %v1055 = vshrl.u32 %v1054, 7
        %v1056 = vsub.s32 0, %v1055
        %v1057 = vrot.slane %v1039, %v1056
        %v1058 = vadd.f32 %v1047, %v1057
        %v1059 = vadd.f32 %v1052, %v1057
        %v1060 = vmul.f32 %v1058, 0.2
        %v1061 = vmul.f32 %v1059, 0.2
        %v1062 = vmax.f32 %v1058, %v1060
        %v1063 = vmax.f32 %v1059, %v1061
        %v1064 = vadd.f32 %v1062, %v344
        %v1065 = vadd.f32 %v1063, %v345
        %v1066 = vsel %vm356, %v1064, -inf
        %1067 = vmax.xlane.f32.xlu0 %v1066
        %v1068 = vpop.xlane.xlu0 %1067
        %v1069 = vsel %vm356, %v1065, -inf
        %1070 = vmax.xlane.f32.xlu0 %v1069
        %v1071 = vpop.xlane.xlu0 %1070
        %v1072 = vsub.f32 %v1064, %v1068
        %v1073 = vsub.f32 %v1065, %v1071
        %v1074 = vmul.f32 %v1072, 1.442695
        %v1075 = vpow.pop %v1074
        %v1076 = vmul.f32 %v1073, 1.442695
        %v1077 = vpow.pop %v1076
        %v1078 = vsel %vm356, %v1075, 0.0
        %1079 = vadd.xlane.f32.xlu0 %v1078
        %v1080 = vpop.xlane.xlu0 %1079
        %v1081 = vsel %vm356, %v1077, 0.0
        %1082 = vadd.xlane.f32.xlu0 %v1081
        %v1083 = vpop.xlane.xlu0 %1082
        %v1084 = vrcp.pop %v1080
        %v1085 = vrcp.pop %v1083
        %v1086 = vmul.f32 %v1075, %v1084
        %v1087 = vmul.f32 %v1077, %v1085
        %v1088 = vpack.c.bf16 %v1087, %v1086
        %v1089 = vpack.c.bf16 %v997, %v994
        %v1090 = vlaneseq
        %v1091 = vshrl.u32 %v1090, 7
        %v1092 = vsub.s32 1, %v1091
        %v1093 = vrot.slane %v942, %v1092
        %v1095 = vsel %vm356, %v1088, 0
        %1097 = vmatprep.subr.bf16.mxu0 0
        %1098 = vmatpush1.bf16.msra.mxu0 %v1089
        %1099 = vmatprep.subr.bf16.mxu0 0
        %1100 = vmatpush1.bf16.msra.mxu0 0
        %1101 = vmatprep.subr.bf16.mxu0 0
        %1102 = vmatpush1.bf16.msra.mxu0 0
        %1103 = vmatprep.subr.bf16.mxu0 0
        %1104 = vmatpush1.bf16.msra.mxu0 0
        %1105 = vmatprep.subr.bf16.mxu0 0
        %1106 = vmatpush1.bf16.msra.mxu0 0
        %1107 = vmatprep.subr.bf16.mxu0 0
        %1108 = vmatpush1.bf16.msra.mxu0 0
        %1109 = vmatprep.subr.bf16.mxu0 0
        %1110 = vmatpush1.bf16.msra.mxu0 0
        %1111 = vmatprep.subr.bf16.mxu0 0
        %1112 = vmatpush1.bf16.msra.mxu0 0
        %1113 = vmatprep.subr.bf16.mxu0 0
        %1114 = vmatpush1.bf16.msra.mxu0 0
        %1115 = vmatprep.subr.bf16.mxu0 0
        %1116 = vmatpush1.bf16.msra.mxu0 0
        %1117 = vmatprep.subr.bf16.mxu0 0
        %1118 = vmatpush1.bf16.msra.mxu0 0
        %1119 = vmatprep.subr.bf16.mxu0 0
        %1120 = vmatpush1.bf16.msra.mxu0 0
        %1121 = vmatprep.subr.bf16.mxu0 0
        %1122 = vmatpush1.bf16.msra.mxu0 0
        %1123 = vmatprep.subr.bf16.mxu0 0
        %1124 = vmatpush1.bf16.msra.mxu0 0
        %1125 = vmatprep.subr.bf16.mxu0 0
        %1126 = vmatpush1.bf16.msra.mxu0 0
        %1127 = vmatprep.subr.bf16.mxu0 0
        %1128 = vmatpush1.bf16.msra.mxu0 0
        %1129 = vmatprep.mubr.bf16.mxu0 0
        %1130 = vmatmul.mubr.bf16.gmra.mrb[0].mxu0 %v1095
        %v1131 = vpop.f32.mrb[0].mxu0
        %v1132 = vadd.f32 %v1093, %v1131
        %v1133 = vpop.f32.mrb[0].mxu0
        %v1134 = vpop.f32.mrb[0].mxu0
        %v1135 = vadd.f32 %v1093, %v1134
        %v1136 = vpop.f32.mrb[0].mxu0
        %1137 = vdwg.mxu0
        %v1138 = vmax.f32 %v1132, 0.0
        %v1139 = vmax.f32 %v1135, 0.0
        %1142 = vrot.lane.b32.xlu0 %v1138, 32
        %v1143 = vpop.permute.xlu0 %1142
        %1144 = vrot.lane.b32.xlu0 %v1139, 32
        %v1145 = vpop.permute.xlu0 %1144
        %v1148 = vsel %vm559, %v742, %v1143
        %v1149 = vsel %vm559, %v743, %v1145
        %vm1150 = vcmask 523264
        %1151 = vst.msk [vmem:[%s338] sm:$0xff] %vm1150, %v1148
        %1152 = vst.msk [vmem:[%s338 + $0x8] sm:$0xff] %vm1150, %v1149
        %s1153 = sand.u32 %s171, 1
        %s1154 = scalar_lea.sflag [#allocation4], %s1153
        %s1155 = sand.u32 %s171, 1
        %s1156 = smul.addr %s1155, 16
        %s1157 = scalar_lea.vmem [#allocation10], %s1156
        // Predicated region
        $region61: #{tpu_custom_call.1} parent=43 // pred_check
          %p1158 = pneg %p181
        $region62: #{tpu_custom_call.1} parent=43 // pred_check_branch
          %1160 = sbr.rel (%p1158) target = $region64
        $region63: #{tpu_custom_call.1} parent=43 // pred_region
          %s1162 = ssub.s32 256, 256
          %1163 = vsyncadd %s1154, %s1162
          %s1164 = smul.addr %s27, 2
          %s1165 = smul.addr %s1164, 128
          %s1166 = scalar_lea.hbm %s6, %s1165
          %s1167 = sshll.u32 %s1157, 4
          %s1168 = int_to_ptr.vmem [resolvable:$true] %s1167
          %1173 = dma.vmem_to_hbm [thread:$0]  %s1168, 256, %s1166, %s1154, 128, 128, 8
        $region64: #{tpu_custom_call.1} parent=43 // pred_fallthru
          _
      $region44: #{tpu_custom_call.1} parent=5 // pred_fallthru
        _
      %p1174 = scmp.le.s32.totalorder 2, %s22
      // Predicated region
      $region65: #{tpu_custom_call.1} parent=5 // pred_check
        %p1175 = pneg %p1174
      $region66: #{tpu_custom_call.1} parent=5 // pred_check_branch
        %1177 = sbr.rel (%p1175) target = $region68
      $region67: #{tpu_custom_call.1} parent=5 // pred_region
        %s1178 = ssub.s32 %s22, 2
        // Predicated region
        $region69: #{tpu_custom_call.1} parent=67 // pred_check
          %p1179 = pneg %p187
        $region70: #{tpu_custom_call.1} parent=67 // pred_check_branch
          %1181 = sbr.rel (%p1179) target = $region72
        $region71: #{tpu_custom_call.1} parent=67 // pred_region
          %s1182 = sand.u32 %s172, 1
          %s1183 = scalar_lea.sflag [#allocation4], %s1182
          %s1184 = sand.u32 %s172, 1
          %s1185 = smul.addr %s1184, 16
          %s1186 = scalar_lea.vmem [#allocation10], %s1185
          %1187 = dma.done %s1183, 256
        $region72: #{tpu_custom_call.1} parent=67 // pred_fallthru
          _
      $region68: #{tpu_custom_call.1} parent=5 // pred_fallthru
        _
    $region6: #{tpu_custom_call.1} parent=1 // loop_footer
      %s26 = sadd.s32 1, %s22
    $region7: #{tpu_custom_call.1} parent=1 // loop_footer_branch
      %21 = sbr.rel target = $region3
    $region8: #{tpu_custom_call.1} parent=1 // loop_exit
      _
    %1188 = vsyncpa [#allocation3], 1
    %s1189 = scalar_lea.sflag [#allocation3], 1
    %1190 = vsyncpa %s1189, 1
    %1191 = vsyncpa [#allocation6], 1
    %s1192 = scalar_lea.sflag [#allocation6], 1
    %1193 = vsyncpa %s1192, 1
    %1194 = vsyncpa [#allocation9], 1
    %1195 = vsyncpa [#allocation4], 1
    %s1196 = scalar_lea.sflag [#allocation4], 1
    %1197 = vsyncpa %s1196, 1

</llo_original>
